<compile_context>
chip_gen: v7x
topology: tpu7x:2x2x1
jax: 0.10.0
libtpu: 0.0.40
codegen_flags: <defaults>
</compile_context>

<pallas_src>
import functools

import jax
import jax.numpy as jnp
from jax import lax
from jax.experimental import pallas as pl
from jax.experimental.pallas import tpu as pltpu


# ------------------------------ Pallas kernel ------------------------------ #

def _cnn_stack_kernel(*refs, layer_cfgs, W, df, ph_top, NB):
    """Fused full CNNFeature stack for NB images (one grid step).

    Row layout ("flat"): image b of a layer with height H occupies rows
    [b*(H+2)+ph_top, b*(H+2)+ph_top+H) of the halo-padded scratches; the other
    rows of each (H+2)-row block are zero halos. A 3x3 conv (H direction) is
    then 3 contiguous, lane-aligned matmuls over M = NB*(H+2)-2 rows.

    Refs (in order): x, per-layer weights, output, per-layer scratches.
      per-layer weights : w1 (3, W*Cin, W*Cout) bf16, b1 (1, W*Cout) f32,
                          w2 (3, W*Cout, W*Cout) bf16, b2 (1, W*Cout) f32,
                          [ws (W*Cin, W*Cout) bf16, bs (1, W*Cout) f32]
      per-layer scratch : pad_in (NB*(H+2), W*Cin)  bf16
                          pad_h  (NB*(H+2), W*Cout) bf16
                          ybuf   (M, W*Cout)        f32
    """
    f32 = jnp.float32
    n_w = sum(6 if proj else 4 for (_, _, _, proj) in layer_cfgs)
    x_ref = refs[0]
    w_refs = refs[1:1 + n_w]
    o_ref = refs[1 + n_w]
    s_refs = refs[2 + n_w:]

    wi = 0
    si = 0
    pooled_prev = None  # per-image pooled outputs of the previous layer (f32)

    for li, (H, Cin, Cout, proj) in enumerate(layer_cfgs):
        WCi, WCo = W * Cin, W * Cout
        Hp = H + 2
        M = NB * Hp - 2                 # matmul M (valid rows + junk seam rows)
        Hout = H // df                  # MaxPool2d floor semantics
        last = (li == len(layer_cfgs) - 1)

        w1 = w_refs[wi]; b1 = w_refs[wi + 1]
        w2 = w_refs[wi + 2]; b2 = w_refs[wi + 3]
        wi += 4
        if proj:
            ws = w_refs[wi]; bs = w_refs[wi + 1]
            wi += 2

        pad_in = s_refs[si]
        pad_h = s_refs[si + 1]
        ybuf = s_refs[si + 2]
        si += 3
        zdt = pad_in.dtype

        # ---- stage this layer's input: interior rows + zeroed halo rows -----
        for b in range(NB):
            base = b * Hp
            if ph_top:
                pad_in[base:base + ph_top, :] = jnp.zeros((ph_top, WCi), zdt)
            if 2 - ph_top:
                pad_in[base + ph_top + H:base + Hp, :] = (
                    jnp.zeros((2 - ph_top, WCi), zdt))
            if li == 0:
                pad_in[base + ph_top:base + ph_top + H, :] = x_ref[b].astype(zdt)
            else:
                pad_in[base + ph_top:base + ph_top + H, :] = (
                    pooled_prev[b].astype(zdt))

        # ---- conv1: 3 aligned MXU matmuls, f32 acc seeded by the first tap --
        acc = jnp.dot(pad_in[0:M, :], w1[0], preferred_element_type=f32)
        acc = acc + jnp.dot(pad_in[1:1 + M, :], w1[1], preferred_element_type=f32)
        acc = acc + jnp.dot(pad_in[2:2 + M, :], w1[2], preferred_element_type=f32)
        h = jnp.maximum(acc + b1[...], 0.0)

        if NB > 1:
            # Zero the 2 junk seam rows per image block so they can't leak into
            # the next image's halo when stored at offset ph_top.
            r = lax.broadcasted_iota(jnp.int32, (M, 1), 0)
            h = jnp.where((r % Hp) >= H, 0.0, h)

        # Stage padded h (bf16) for conv2: one aligned interior store, then
        # only the ph_top top rows / (2-ph_top) bottom rows are zeroed.
        pad_h[ph_top:ph_top + M, :] = h.astype(pad_h.dtype)
        if ph_top:
            pad_h[0:ph_top, :] = jnp.zeros((ph_top, WCo), pad_h.dtype)
        if 2 - ph_top:
            pad_h[ph_top + M:NB * Hp, :] = jnp.zeros((2 - ph_top, WCo),
                                                     pad_h.dtype)

        # ---- skip path (computed in the epilogue) seeds the conv2 acc -------
        x_center = pad_in[ph_top:ph_top + M, :]
        if proj:
            skip = jnp.dot(x_center, ws[...], preferred_element_type=f32)
            skip = skip + bs[...]
        else:  # identity skip (Cin == Cout)
            skip = x_center.astype(f32)
        acc2 = skip + b2[...]
        acc2 = acc2 + jnp.dot(pad_h[0:M, :], w2[0], preferred_element_type=f32)
        acc2 = acc2 + jnp.dot(pad_h[1:1 + M, :], w2[1], preferred_element_type=f32)
        acc2 = acc2 + jnp.dot(pad_h[2:2 + M, :], w2[2], preferred_element_type=f32)
        ybuf[...] = jnp.maximum(acc2, 0.0)

        # ---- fused MaxPool2d((df,1)) via strided ref reads ------------------
        pooled_list = []
        for b in range(NB):
            base = b * Hp
            p = ybuf[pl.ds(base, Hout, stride=df), :]
            for d in range(1, df):
                p = jnp.maximum(p, ybuf[pl.ds(base + d, Hout, stride=df), :])
            if last:
                o_ref[b] = p.astype(o_ref.dtype)
            else:
                pooled_list.append(p)
        pooled_prev = pooled_list
        # nn.Dropout2d: identity at inference time.


# ----------------------------- weight plumbing ----------------------------- #

def _banded_weight(w_oihw, W, dtype):
    """PyTorch (Cout, Cin, 3, 3) -> (3, W*Cin, W*Cout) banded weight.

    band[di, u*Cin+i, v*Cout+o] = w[o, i, di, u-v+1] when |u-v| <= 1 else 0,
    so a single (M, W*Cin) @ (W*Cin, W*Cout) matmul applies all 3 width taps
    (and the width zero-padding) for one H tap di.
    """
    co, ci, kh, kw = w_oihw.shape
    w_t = jnp.transpose(w_oihw, (2, 3, 1, 0)).astype(jnp.float32)  # (kh,kw,ci,co)
    band = jnp.zeros((kh, W * ci, W * co), jnp.float32)
    for dj in range(kw):
        off = dj - (kw // 2)                       # -1, 0, +1
        s = jnp.eye(W, k=-off, dtype=jnp.float32)  # s[u, v] = 1 iff u - v == off
        band = band + jnp.einsum("uv,kio->kuivo", s,
                                 w_t[:, dj]).reshape(kh, W * ci, W * co)
    return band.astype(dtype)


def _blockdiag_1x1(ws_oihw, W, dtype):
    """(Cout, Cin, 1, 1) -> (W*Cin, W*Cout) block-diagonal projection weight."""
    co, ci = ws_oihw.shape[0], ws_oihw.shape[1]
    wt = ws_oihw.reshape(co, ci).T.astype(jnp.float32)   # (ci, co)
    s = jnp.eye(W, dtype=jnp.float32)
    return jnp.einsum("uv,io->uivo", s, wt).reshape(W * ci, W * co).astype(dtype)


def _tiled_bias(b, W):
    """(Cout,) -> (1, W*Cout) f32 with lane index = w*Cout + co."""
    return jnp.tile(b.astype(jnp.float32), W).reshape(1, -1)


def _pick_images_per_step(N, H):
    """NB images per grid step: keep >=2 'parallel' steps (v7x's 2 TCs), and
    when N allows, batch images so the matmul M ~= NB*(H+2) reaches ~256."""
    if N <= 2:
        return 1
    target = max(1, 256 // (H + 2))
    best = 1
    for cand in range(1, N + 1):
        if N % cand == 0 and N // cand >= 2 and cand <= target:
            best = max(best, cand)
    return best


# -------------------------------- forward ---------------------------------- #

def cnn_feature_forward(x_nchw, layer_params, down_sample_factor, causal,
                        compute_dtype=jnp.bfloat16):
    if not layer_params:
        return x_nchw                               # n_layers == 0 -> Identity
    N, C0, H0, W = x_nchw.shape
    df = down_sample_factor
    ph_top = 2 if causal else 1                      # 3x3 conv: total H pad = 2

    # NCHW -> (N, H, W*C): channels-last with width folded into the lane axis.
    x = jnp.transpose(x_nchw, (0, 2, 3, 1)).reshape(N, H0, W * C0)
    x = x.astype(compute_dtype)

    NB = _pick_images_per_step(N, H0)
    grid = (N // NB,)

    layer_cfgs = []
    weight_arrays = []
    in_specs = [pl.BlockSpec((NB, H0, W * C0), lambda n: (n, 0, 0))]
    scratch_shapes = []

    H, Cin = H0, C0
    for p in layer_params:
        Cout = p["w1"].shape[0]
        proj = (Cin != Cout)
        layer_cfgs.append((H, Cin, Cout, proj))
        WCi, WCo = W * Cin, W * Cout
        Hp = H + 2
        M = NB * Hp - 2

        weight_arrays += [
            _banded_weight(p["w1"], W, compute_dtype),   # (3, WCi, WCo)
            _tiled_bias(p["b1"], W),                     # (1, WCo)
            _banded_weight(p["w2"], W, compute_dtype),   # (3, WCo, WCo)
            _tiled_bias(p["b2"], W),                     # (1, WCo)
        ]
        in_specs += [
            pl.BlockSpec((3, WCi, WCo), lambda n: (0, 0, 0)),
            pl.BlockSpec((1, WCo), lambda n: (0, 0)),
            pl.BlockSpec((3, WCo, WCo), lambda n: (0, 0, 0)),
            pl.BlockSpec((1, WCo), lambda n: (0, 0)),
        ]
        if proj:
            weight_arrays += [
                _blockdiag_1x1(p["ws"], W, compute_dtype),   # (WCi, WCo)
                _tiled_bias(p["bs"], W),                     # (1, WCo)
            ]
            in_specs += [
                pl.BlockSpec((WCi, WCo), lambda n: (0, 0)),
                pl.BlockSpec((1, WCo), lambda n: (0, 0)),
            ]

        scratch_shapes += [
            pltpu.VMEM((NB * Hp, WCi), compute_dtype),   # halo-padded layer input
            pltpu.VMEM((NB * Hp, WCo), compute_dtype),   # halo-padded intermediate h
            pltpu.VMEM((M, WCo), jnp.float32),           # pre-pool conv2 output
        ]

        H, Cin = H // df, Cout

    Hf, Cf = H, Cin
    kernel = functools.partial(_cnn_stack_kernel, layer_cfgs=tuple(layer_cfgs),
                               W=W, df=df, ph_top=ph_top, NB=NB)

    out = pl.pallas_call(
        kernel,
        out_shape=jax.ShapeDtypeStruct((N, Hf, W * Cf), compute_dtype),
        grid=grid,
        in_specs=in_specs,
        out_specs=pl.BlockSpec((NB, Hf, W * Cf), lambda n: (n, 0, 0)),
        scratch_shapes=scratch_shapes,
        compiler_params=pltpu.CompilerParams(
            dimension_semantics=("parallel",),        # split batch over the TCs
            vmem_limit_bytes=32 * 1024 * 1024),
    )(x, *weight_arrays)

    out = out.reshape(N, Hf, W, Cf)
    return jnp.transpose(out, (0, 3, 1, 2)).astype(x_nchw.dtype)   # NHWC -> NCHW


# ------------------------------ f32 reference ------------------------------- #

def _reference_forward(x_nchw, layer_params, df, causal):
    ph_top = 2 if causal else 1
    dn = ("NCHW", "OIHW", "NCHW")
    x = x_nchw.astype(jnp.float32)
    for p in layer_params:
        def conv3(z, w, b):
            y = lax.conv_general_dilated(z, w.astype(jnp.float32), (1, 1),
                                         ((ph_top, 2 - ph_top), (1, 1)),
                                         dimension_numbers=dn)
            return y + b[None, :, None, None]
        if "ws" in p:
            skip = lax.conv_general_dilated(x, p["ws"].astype(jnp.float32),
                                            (1, 1), ((0, 0), (0, 0)),
                                            dimension_numbers=dn)
            skip = skip + p["bs"][None, :, None, None]
        else:
            skip = x
        h = jnp.maximum(conv3(x, p["w1"], p["b1"]), 0.0)
        y = jnp.maximum(conv3(h, p["w2"], p["b2"]) + skip, 0.0)
        x = lax.reduce_window(y, -jnp.inf, lax.max,
                              (1, 1, df, 1), (1, 1, df, 1), "VALID")
    return x


# --------------------------------- params ----------------------------------- #

def init_params(key, in_channels, num_channels, n_layers, channel_multiplication):
    params = []
    cin = in_channels
    for i in range(n_layers):
        cout = num_channels * channel_multiplication ** i
        key, k1, k2, k3 = jax.random.split(key, 4)
        p = {
            "w1": 0.1 * jax.random.normal(k1, (cout, cin, 3, 3), jnp.float32),
            "b1": jnp.zeros((cout,), jnp.float32),
            "w2": 0.1 * jax.random.normal(k2, (cout, cout, 3, 3), jnp.float32),
            "b2": jnp.zeros((cout,), jnp.float32),
        }
        if cin != cout:
            p["ws"] = 0.1 * jax.random.normal(k3, (cout, cin, 1, 1), jnp.float32)
            p["bs"] = jnp.zeros((cout,), jnp.float32)
        params.append(p)
        cin = cout
    return params


# ---------------------------------- main ------------------------------------ #

if __name__ == "__main__":
    # CNNFeature(num_channels=4, n_layers=2, down_sample_factor=2,
    #            channel_multiplication=2, activation=ReLU, causal=False,
    #            dropout=0.0, in_channels=1)
    num_channels = 4
    n_layers = 2
    down_sample_factor = 2
    channel_multiplication = 2
    causal = False
    in_channels = 1

    key = jax.random.PRNGKey(0)
    key, kx = jax.random.split(key)
    x = jax.random.normal(kx, (2, in_channels, 16, 16), jnp.float32)  # NCHW

    params = init_params(key, in_channels, num_channels, n_layers,
                         channel_multiplication)

    fwd = jax.jit(functools.partial(cnn_feature_forward,
                                    down_sample_factor=down_sample_factor,
                                    causal=causal))
    out = jax.block_until_ready(fwd(x, params))

    # Expected NCHW shape: (2, 8, 4, 16)  [C = 4*2^(n_layers-1), H = 16/2^n_layers]
    assert out.shape == (2, num_channels * channel_multiplication ** (n_layers - 1),
                         16 // down_sample_factor ** n_layers, 16), out.shape
    assert bool(jnp.all(jnp.isfinite(out)))

    ref = _reference_forward(x, params, down_sample_factor, causal)
    err = float(jnp.max(jnp.abs(out.astype(jnp.float32) - ref)))
    assert err < 0.1, f"max abs error vs f32 reference: {err}"

    print("KERNEL_OK")
</pallas_src>

<mosaic_0001>
module attributes {stable_mosaic.version = 11 : i64} {
  func.func @_cnn_stack_kernel(%arg0: i32, %arg1: memref<1x16x16xbf16, #tpu.memory_space<vmem>>, %arg2: memref<3x16x64xbf16, #tpu.memory_space<vmem>>, %arg3: memref<1x64xf32, #tpu.memory_space<vmem>>, %arg4: memref<3x64x64xbf16, #tpu.memory_space<vmem>>, %arg5: memref<1x64xf32, #tpu.memory_space<vmem>>, %arg6: memref<16x64xbf16, #tpu.memory_space<vmem>>, %arg7: memref<1x64xf32, #tpu.memory_space<vmem>>, %arg8: memref<3x64x128xbf16, #tpu.memory_space<vmem>>, %arg9: memref<1x128xf32, #tpu.memory_space<vmem>>, %arg10: memref<3x128x128xbf16, #tpu.memory_space<vmem>>, %arg11: memref<1x128xf32, #tpu.memory_space<vmem>>, %arg12: memref<64x128xbf16, #tpu.memory_space<vmem>>, %arg13: memref<1x128xf32, #tpu.memory_space<vmem>>, %arg14: memref<1x4x128xbf16, #tpu.memory_space<vmem>>, %arg15: memref<18x16xbf16, #tpu.memory_space<vmem>>, %arg16: memref<18x64xbf16, #tpu.memory_space<vmem>>, %arg17: memref<16x64xf32, #tpu.memory_space<vmem>>, %arg18: memref<10x64xbf16, #tpu.memory_space<vmem>>, %arg19: memref<10x128xbf16, #tpu.memory_space<vmem>>, %arg20: memref<8x128xf32, #tpu.memory_space<vmem>>) attributes {dimension_semantics = [#tpu.dimension_semantics<parallel>], iteration_bounds = array<i64: 2>, scalar_prefetch = 0 : i64, scratch_operands = 6 : i64, tpu.core_type = #tpu.core_type<tc>, window_params = [{transform_indices = @transform_0, window_bounds = array<i64: 1, 16, 16>}, {pipeline_mode = #tpu.pipeline_mode<synchronous>, transform_indices = @transform_1, window_bounds = array<i64: 3, 16, 64>}, {pipeline_mode = #tpu.pipeline_mode<synchronous>, transform_indices = @transform_2, window_bounds = array<i64: 1, 64>}, {pipeline_mode = #tpu.pipeline_mode<synchronous>, transform_indices = @transform_3, window_bounds = array<i64: 3, 64, 64>}, {pipeline_mode = #tpu.pipeline_mode<synchronous>, transform_indices = @transform_4, window_bounds = array<i64: 1, 64>}, {pipeline_mode = #tpu.pipeline_mode<synchronous>, transform_indices = @transform_5, window_bounds = array<i64: 16, 64>}, {pipeline_mode = #tpu.pipeline_mode<synchronous>, transform_indices = @transform_6, window_bounds = array<i64: 1, 64>}, {pipeline_mode = #tpu.pipeline_mode<synchronous>, transform_indices = @transform_7, window_bounds = array<i64: 3, 64, 128>}, {pipeline_mode = #tpu.pipeline_mode<synchronous>, transform_indices = @transform_8, window_bounds = array<i64: 1, 128>}, {pipeline_mode = #tpu.pipeline_mode<synchronous>, transform_indices = @transform_9, window_bounds = array<i64: 3, 128, 128>}, {pipeline_mode = #tpu.pipeline_mode<synchronous>, transform_indices = @transform_10, window_bounds = array<i64: 1, 128>}, {pipeline_mode = #tpu.pipeline_mode<synchronous>, transform_indices = @transform_11, window_bounds = array<i64: 64, 128>}, {pipeline_mode = #tpu.pipeline_mode<synchronous>, transform_indices = @transform_12, window_bounds = array<i64: 1, 128>}, {transform_indices = @transform_13, window_bounds = array<i64: 1, 4, 128>}]} {
    %cst = arith.constant 0.000000e+00 : bf16
    %0 = vector.broadcast %cst : bf16 to vector<1x16xbf16>
    %c0 = arith.constant 0 : index
    %c0_0 = arith.constant 0 : index
    %1 = vector.load %arg15[%c0, %c0_0] : memref<18x16xbf16, #tpu.memory_space<vmem>>, vector<1x16xbf16>
    tpu.vector_store %arg15[%c0, %c0_0], %0 {strides = array<i32>} : memref<18x16xbf16, #tpu.memory_space<vmem>>, vector<1x16xbf16>,
    %cst_1 = arith.constant 0.000000e+00 : bf16
    %2 = vector.broadcast %cst_1 : bf16 to vector<1x16xbf16>
    %c17 = arith.constant 17 : index
    %c0_2 = arith.constant 0 : index
    %3 = vector.load %arg15[%c17, %c0_2] : memref<18x16xbf16, #tpu.memory_space<vmem>>, vector<1x16xbf16>
    tpu.vector_store %arg15[%c17, %c0_2], %2 {strides = array<i32>} : memref<18x16xbf16, #tpu.memory_space<vmem>>, vector<1x16xbf16>,
    %c0_3 = arith.constant 0 : index
    %c0_4 = arith.constant 0 : index
    %c0_5 = arith.constant 0 : index
    %4 = vector.load %arg1[%c0_3, %c0_4, %c0_5] : memref<1x16x16xbf16, #tpu.memory_space<vmem>>, vector<1x16x16xbf16>
    %5 = vector.shape_cast %4 : vector<1x16x16xbf16> to vector<16x16xbf16>
    %c1 = arith.constant 1 : index
    %c0_6 = arith.constant 0 : index
    %6 = vector.load %arg15[%c1, %c0_6] : memref<18x16xbf16, #tpu.memory_space<vmem>>, vector<16x16xbf16>
    tpu.vector_store %arg15[%c1, %c0_6], %5 {strides = array<i32>} : memref<18x16xbf16, #tpu.memory_space<vmem>>, vector<16x16xbf16>,
    %c0_7 = arith.constant 0 : index
    %c0_8 = arith.constant 0 : index
    %7 = vector.load %arg15[%c0_7, %c0_8] : memref<18x16xbf16, #tpu.memory_space<vmem>>, vector<16x16xbf16>
    %c0_9 = arith.constant 0 : index
    %c0_10 = arith.constant 0 : index
    %c0_11 = arith.constant 0 : index
    %8 = vector.load %arg2[%c0_9, %c0_10, %c0_11] : memref<3x16x64xbf16, #tpu.memory_space<vmem>>, vector<1x16x64xbf16>
    %9 = vector.shape_cast %8 : vector<1x16x64xbf16> to vector<16x64xbf16>
    %cst_12 = arith.constant dense<0.000000e+00> : vector<16x64xf32>
    %10 = tpu.matmul %7, %9, %cst_12 {dimension_numbers = #tpu.dot_dimension_numbers<[1], [0], [0], [1], [0, 0, 1, 1], [], []>} : vector<16x16xbf16>, vector<16x64xbf16>, vector<16x64xf32> -> vector<16x64xf32>
    %c1_13 = arith.constant 1 : index
    %c0_14 = arith.constant 0 : index
    %11 = vector.load %arg15[%c1_13, %c0_14] : memref<18x16xbf16, #tpu.memory_space<vmem>>, vector<16x16xbf16>
    %c1_15 = arith.constant 1 : index
    %c0_16 = arith.constant 0 : index
    %c0_17 = arith.constant 0 : index
    %12 = vector.load %arg2[%c1_15, %c0_16, %c0_17] : memref<3x16x64xbf16, #tpu.memory_space<vmem>>, vector<1x16x64xbf16>
    %13 = vector.shape_cast %12 : vector<1x16x64xbf16> to vector<16x64xbf16>
    %cst_18 = arith.constant dense<0.000000e+00> : vector<16x64xf32>
    %14 = tpu.matmul %11, %13, %cst_18 {dimension_numbers = #tpu.dot_dimension_numbers<[1], [0], [0], [1], [0, 0, 1, 1], [], []>} : vector<16x16xbf16>, vector<16x64xbf16>, vector<16x64xf32> -> vector<16x64xf32>
    %15 = arith.addf %10, %14 : vector<16x64xf32>
    %c2 = arith.constant 2 : index
    %c0_19 = arith.constant 0 : index
    %16 = vector.load %arg15[%c2, %c0_19] : memref<18x16xbf16, #tpu.memory_space<vmem>>, vector<16x16xbf16>
    %c2_20 = arith.constant 2 : index
    %c0_21 = arith.constant 0 : index
    %c0_22 = arith.constant 0 : index
    %17 = vector.load %arg2[%c2_20, %c0_21, %c0_22] : memref<3x16x64xbf16, #tpu.memory_space<vmem>>, vector<1x16x64xbf16>
    %18 = vector.shape_cast %17 : vector<1x16x64xbf16> to vector<16x64xbf16>
    %cst_23 = arith.constant dense<0.000000e+00> : vector<16x64xf32>
    %19 = tpu.matmul %16, %18, %cst_23 {dimension_numbers = #tpu.dot_dimension_numbers<[1], [0], [0], [1], [0, 0, 1, 1], [], []>} : vector<16x16xbf16>, vector<16x64xbf16>, vector<16x64xf32> -> vector<16x64xf32>
    %20 = arith.addf %15, %19 : vector<16x64xf32>
    %c0_24 = arith.constant 0 : index
    %c0_25 = arith.constant 0 : index
    %21 = vector.load %arg3[%c0_24, %c0_25] : memref<1x64xf32, #tpu.memory_space<vmem>>, vector<1x64xf32>
    %22 = vector.broadcast %21 : vector<1x64xf32> to vector<16x64xf32>
    %23 = arith.addf %20, %22 : vector<16x64xf32>
    %cst_26 = arith.constant 0.000000e+00 : f32
    %24 = vector.broadcast %cst_26 : f32 to vector<16x64xf32>
    %25 = arith.maximumf %23, %24 : vector<16x64xf32>
    %26 = arith.truncf %25 : vector<16x64xf32> to vector<16x64xbf16>
    %c1_27 = arith.constant 1 : index
    %c0_28 = arith.constant 0 : index
    %27 = vector.load %arg16[%c1_27, %c0_28] : memref<18x64xbf16, #tpu.memory_space<vmem>>, vector<16x64xbf16>
    tpu.vector_store %arg16[%c1_27, %c0_28], %26 {strides = array<i32>} : memref<18x64xbf16, #tpu.memory_space<vmem>>, vector<16x64xbf16>,
    %cst_29 = arith.constant 0.000000e+00 : bf16
    %28 = vector.broadcast %cst_29 : bf16 to vector<1x64xbf16>
    %c0_30 = arith.constant 0 : index
    %c0_31 = arith.constant 0 : index
    %29 = vector.load %arg16[%c0_30, %c0_31] : memref<18x64xbf16, #tpu.memory_space<vmem>>, vector<1x64xbf16>
    tpu.vector_store %arg16[%c0_30, %c0_31], %28 {strides = array<i32>} : memref<18x64xbf16, #tpu.memory_space<vmem>>, vector<1x64xbf16>,
    %cst_32 = arith.constant 0.000000e+00 : bf16
    %30 = vector.broadcast %cst_32 : bf16 to vector<1x64xbf16>
    %c17_33 = arith.constant 17 : index
    %c0_34 = arith.constant 0 : index
    %31 = vector.load %arg16[%c17_33, %c0_34] : memref<18x64xbf16, #tpu.memory_space<vmem>>, vector<1x64xbf16>
    tpu.vector_store %arg16[%c17_33, %c0_34], %30 {strides = array<i32>} : memref<18x64xbf16, #tpu.memory_space<vmem>>, vector<1x64xbf16>,
    %c1_35 = arith.constant 1 : index
    %c0_36 = arith.constant 0 : index
    %32 = vector.load %arg15[%c1_35, %c0_36] : memref<18x16xbf16, #tpu.memory_space<vmem>>, vector<16x16xbf16>
    %c0_37 = arith.constant 0 : index
    %c0_38 = arith.constant 0 : index
    %33 = vector.load %arg6[%c0_37, %c0_38] : memref<16x64xbf16, #tpu.memory_space<vmem>>, vector<16x64xbf16>
    %cst_39 = arith.constant dense<0.000000e+00> : vector<16x64xf32>
    %34 = tpu.matmul %32, %33, %cst_39 {dimension_numbers = #tpu.dot_dimension_numbers<[1], [0], [0], [1], [0, 0, 1, 1], [], []>} : vector<16x16xbf16>, vector<16x64xbf16>, vector<16x64xf32> -> vector<16x64xf32>
    %c0_40 = arith.constant 0 : index
    %c0_41 = arith.constant 0 : index
    %35 = vector.load %arg7[%c0_40, %c0_41] : memref<1x64xf32, #tpu.memory_space<vmem>>, vector<1x64xf32>
    %36 = vector.broadcast %35 : vector<1x64xf32> to vector<16x64xf32>
    %37 = arith.addf %34, %36 : vector<16x64xf32>
    %c0_42 = arith.constant 0 : index
    %c0_43 = arith.constant 0 : index
    %38 = vector.load %arg5[%c0_42, %c0_43] : memref<1x64xf32, #tpu.memory_space<vmem>>, vector<1x64xf32>
    %39 = vector.broadcast %38 : vector<1x64xf32> to vector<16x64xf32>
    %40 = arith.addf %37, %39 : vector<16x64xf32>
    %c0_44 = arith.constant 0 : index
    %c0_45 = arith.constant 0 : index
    %41 = vector.load %arg16[%c0_44, %c0_45] : memref<18x64xbf16, #tpu.memory_space<vmem>>, vector<16x64xbf16>
    %c0_46 = arith.constant 0 : index
    %c0_47 = arith.constant 0 : index
    %c0_48 = arith.constant 0 : index
    %42 = vector.load %arg4[%c0_46, %c0_47, %c0_48] : memref<3x64x64xbf16, #tpu.memory_space<vmem>>, vector<1x64x64xbf16>
    %43 = vector.shape_cast %42 : vector<1x64x64xbf16> to vector<64x64xbf16>
    %cst_49 = arith.constant dense<0.000000e+00> : vector<16x64xf32>
    %44 = tpu.matmul %41, %43, %cst_49 {dimension_numbers = #tpu.dot_dimension_numbers<[1], [0], [0], [1], [0, 0, 1, 1], [], []>} : vector<16x64xbf16>, vector<64x64xbf16>, vector<16x64xf32> -> vector<16x64xf32>
    %45 = arith.addf %40, %44 : vector<16x64xf32>
    %c1_50 = arith.constant 1 : index
    %c0_51 = arith.constant 0 : index
    %46 = vector.load %arg16[%c1_50, %c0_51] : memref<18x64xbf16, #tpu.memory_space<vmem>>, vector<16x64xbf16>
    %c1_52 = arith.constant 1 : index
    %c0_53 = arith.constant 0 : index
    %c0_54 = arith.constant 0 : index
    %47 = vector.load %arg4[%c1_52, %c0_53, %c0_54] : memref<3x64x64xbf16, #tpu.memory_space<vmem>>, vector<1x64x64xbf16>
    %48 = vector.shape_cast %47 : vector<1x64x64xbf16> to vector<64x64xbf16>
    %cst_55 = arith.constant dense<0.000000e+00> : vector<16x64xf32>
    %49 = tpu.matmul %46, %48, %cst_55 {dimension_numbers = #tpu.dot_dimension_numbers<[1], [0], [0], [1], [0, 0, 1, 1], [], []>} : vector<16x64xbf16>, vector<64x64xbf16>, vector<16x64xf32> -> vector<16x64xf32>
    %50 = arith.addf %45, %49 : vector<16x64xf32>
    %c2_56 = arith.constant 2 : index
    %c0_57 = arith.constant 0 : index
    %51 = vector.load %arg16[%c2_56, %c0_57] : memref<18x64xbf16, #tpu.memory_space<vmem>>, vector<16x64xbf16>
    %c2_58 = arith.constant 2 : index
    %c0_59 = arith.constant 0 : index
    %c0_60 = arith.constant 0 : index
    %52 = vector.load %arg4[%c2_58, %c0_59, %c0_60] : memref<3x64x64xbf16, #tpu.memory_space<vmem>>, vector<1x64x64xbf16>
    %53 = vector.shape_cast %52 : vector<1x64x64xbf16> to vector<64x64xbf16>
    %cst_61 = arith.constant dense<0.000000e+00> : vector<16x64xf32>
    %54 = tpu.matmul %51, %53, %cst_61 {dimension_numbers = #tpu.dot_dimension_numbers<[1], [0], [0], [1], [0, 0, 1, 1], [], []>} : vector<16x64xbf16>, vector<64x64xbf16>, vector<16x64xf32> -> vector<16x64xf32>
    %55 = arith.addf %50, %54 : vector<16x64xf32>
    %cst_62 = arith.constant 0.000000e+00 : f32
    %56 = vector.broadcast %cst_62 : f32 to vector<16x64xf32>
    %57 = arith.maximumf %55, %56 : vector<16x64xf32>
    %c0_63 = arith.constant 0 : index
    %c0_64 = arith.constant 0 : index
    %58 = vector.load %arg17[%c0_63, %c0_64] : memref<16x64xf32, #tpu.memory_space<vmem>>, vector<16x64xf32>
    tpu.vector_store %arg17[%c0_63, %c0_64], %57 {strides = array<i32>} : memref<16x64xf32, #tpu.memory_space<vmem>>, vector<16x64xf32>,
    %c0_65 = arith.constant 0 : index
    %c0_66 = arith.constant 0 : index
    %59 = tpu.strided_load %arg17[%c0_65, %c0_66] {strides = array<i32: 2, 1>} : memref<16x64xf32, #tpu.memory_space<vmem>>, vector<8x64xf32>
    %c1_67 = arith.constant 1 : index
    %c0_68 = arith.constant 0 : index
    %60 = tpu.strided_load %arg17[%c1_67, %c0_68] {strides = array<i32: 2, 1>} : memref<16x64xf32, #tpu.memory_space<vmem>>, vector<8x64xf32>
    %61 = arith.maximumf %59, %60 : vector<8x64xf32>
    %cst_69 = arith.constant 0.000000e+00 : bf16
    %62 = vector.broadcast %cst_69 : bf16 to vector<1x64xbf16>
    %c0_70 = arith.constant 0 : index
    %c0_71 = arith.constant 0 : index
    %63 = vector.load %arg18[%c0_70, %c0_71] : memref<10x64xbf16, #tpu.memory_space<vmem>>, vector<1x64xbf16>
    tpu.vector_store %arg18[%c0_70, %c0_71], %62 {strides = array<i32>} : memref<10x64xbf16, #tpu.memory_space<vmem>>, vector<1x64xbf16>,
    %cst_72 = arith.constant 0.000000e+00 : bf16
    %64 = vector.broadcast %cst_72 : bf16 to vector<1x64xbf16>
    %c9 = arith.constant 9 : index
    %c0_73 = arith.constant 0 : index
    %65 = vector.load %arg18[%c9, %c0_73] : memref<10x64xbf16, #tpu.memory_space<vmem>>, vector<1x64xbf16>
    tpu.vector_store %arg18[%c9, %c0_73], %64 {strides = array<i32>} : memref<10x64xbf16, #tpu.memory_space<vmem>>, vector<1x64xbf16>,
    %66 = arith.truncf %61 : vector<8x64xf32> to vector<8x64xbf16>
    %c1_74 = arith.constant 1 : index
    %c0_75 = arith.constant 0 : index
    %67 = vector.load %arg18[%c1_74, %c0_75] : memref<10x64xbf16, #tpu.memory_space<vmem>>, vector<8x64xbf16>
    tpu.vector_store %arg18[%c1_74, %c0_75], %66 {strides = array<i32>} : memref<10x64xbf16, #tpu.memory_space<vmem>>, vector<8x64xbf16>,
    %c0_76 = arith.constant 0 : index
    %c0_77 = arith.constant 0 : index
    %68 = vector.load %arg18[%c0_76, %c0_77] : memref<10x64xbf16, #tpu.memory_space<vmem>>, vector<8x64xbf16>
    %c0_78 = arith.constant 0 : index
    %c0_79 = arith.constant 0 : index
    %c0_80 = arith.constant 0 : index
    %69 = vector.load %arg8[%c0_78, %c0_79, %c0_80] : memref<3x64x128xbf16, #tpu.memory_space<vmem>>, vector<1x64x128xbf16>
    %70 = vector.shape_cast %69 : vector<1x64x128xbf16> to vector<64x128xbf16>
    %cst_81 = arith.constant dense<0.000000e+00> : vector<8x128xf32>
    %71 = tpu.matmul %68, %70, %cst_81 {dimension_numbers = #tpu.dot_dimension_numbers<[1], [0], [0], [1], [0, 0, 1, 1], [], []>} : vector<8x64xbf16>, vector<64x128xbf16>, vector<8x128xf32> -> vector<8x128xf32>
    %c1_82 = arith.constant 1 : index
    %c0_83 = arith.constant 0 : index
    %72 = vector.load %arg18[%c1_82, %c0_83] : memref<10x64xbf16, #tpu.memory_space<vmem>>, vector<8x64xbf16>
    %c1_84 = arith.constant 1 : index
    %c0_85 = arith.constant 0 : index
    %c0_86 = arith.constant 0 : index
    %73 = vector.load %arg8[%c1_84, %c0_85, %c0_86] : memref<3x64x128xbf16, #tpu.memory_space<vmem>>, vector<1x64x128xbf16>
    %74 = vector.shape_cast %73 : vector<1x64x128xbf16> to vector<64x128xbf16>
    %cst_87 = arith.constant dense<0.000000e+00> : vector<8x128xf32>
    %75 = tpu.matmul %72, %74, %cst_87 {dimension_numbers = #tpu.dot_dimension_numbers<[1], [0], [0], [1], [0, 0, 1, 1], [], []>} : vector<8x64xbf16>, vector<64x128xbf16>, vector<8x128xf32> -> vector<8x128xf32>
    %76 = arith.addf %71, %75 : vector<8x128xf32>
    %c2_88 = arith.constant 2 : index
    %c0_89 = arith.constant 0 : index
    %77 = vector.load %arg18[%c2_88, %c0_89] : memref<10x64xbf16, #tpu.memory_space<vmem>>, vector<8x64xbf16>
    %c2_90 = arith.constant 2 : index
    %c0_91 = arith.constant 0 : index
    %c0_92 = arith.constant 0 : index
    %78 = vector.load %arg8[%c2_90, %c0_91, %c0_92] : memref<3x64x128xbf16, #tpu.memory_space<vmem>>, vector<1x64x128xbf16>
    %79 = vector.shape_cast %78 : vector<1x64x128xbf16> to vector<64x128xbf16>
    %cst_93 = arith.constant dense<0.000000e+00> : vector<8x128xf32>
    %80 = tpu.matmul %77, %79, %cst_93 {dimension_numbers = #tpu.dot_dimension_numbers<[1], [0], [0], [1], [0, 0, 1, 1], [], []>} : vector<8x64xbf16>, vector<64x128xbf16>, vector<8x128xf32> -> vector<8x128xf32>
    %81 = arith.addf %76, %80 : vector<8x128xf32>
    %c0_94 = arith.constant 0 : index
    %c0_95 = arith.constant 0 : index
    %82 = vector.load %arg9[%c0_94, %c0_95] : memref<1x128xf32, #tpu.memory_space<vmem>>, vector<1x128xf32>
    %83 = vector.broadcast %82 : vector<1x128xf32> to vector<8x128xf32>
    %84 = arith.addf %81, %83 : vector<8x128xf32>
    %cst_96 = arith.constant 0.000000e+00 : f32
    %85 = vector.broadcast %cst_96 : f32 to vector<8x128xf32>
    %86 = arith.maximumf %84, %85 : vector<8x128xf32>
    %87 = arith.truncf %86 : vector<8x128xf32> to vector<8x128xbf16>
    %c1_97 = arith.constant 1 : index
    %c0_98 = arith.constant 0 : index
    %88 = vector.load %arg19[%c1_97, %c0_98] : memref<10x128xbf16, #tpu.memory_space<vmem>>, vector<8x128xbf16>
    tpu.vector_store %arg19[%c1_97, %c0_98], %87 {strides = array<i32>} : memref<10x128xbf16, #tpu.memory_space<vmem>>, vector<8x128xbf16>,
    %cst_99 = arith.constant 0.000000e+00 : bf16
    %89 = vector.broadcast %cst_99 : bf16 to vector<1x128xbf16>
    %c0_100 = arith.constant 0 : index
    %c0_101 = arith.constant 0 : index
    %90 = vector.load %arg19[%c0_100, %c0_101] : memref<10x128xbf16, #tpu.memory_space<vmem>>, vector<1x128xbf16>
    tpu.vector_store %arg19[%c0_100, %c0_101], %89 {strides = array<i32>} : memref<10x128xbf16, #tpu.memory_space<vmem>>, vector<1x128xbf16>,
    %cst_102 = arith.constant 0.000000e+00 : bf16
    %91 = vector.broadcast %cst_102 : bf16 to vector<1x128xbf16>
    %c9_103 = arith.constant 9 : index
    %c0_104 = arith.constant 0 : index
    %92 = vector.load %arg19[%c9_103, %c0_104] : memref<10x128xbf16, #tpu.memory_space<vmem>>, vector<1x128xbf16>
    tpu.vector_store %arg19[%c9_103, %c0_104], %91 {strides = array<i32>} : memref<10x128xbf16, #tpu.memory_space<vmem>>, vector<1x128xbf16>,
    %c1_105 = arith.constant 1 : index
    %c0_106 = arith.constant 0 : index
    %93 = vector.load %arg18[%c1_105, %c0_106] : memref<10x64xbf16, #tpu.memory_space<vmem>>, vector<8x64xbf16>
    %c0_107 = arith.constant 0 : index
    %c0_108 = arith.constant 0 : index
    %94 = vector.load %arg12[%c0_107, %c0_108] : memref<64x128xbf16, #tpu.memory_space<vmem>>, vector<64x128xbf16>
    %cst_109 = arith.constant dense<0.000000e+00> : vector<8x128xf32>
    %95 = tpu.matmul %93, %94, %cst_109 {dimension_numbers = #tpu.dot_dimension_numbers<[1], [0], [0], [1], [0, 0, 1, 1], [], []>} : vector<8x64xbf16>, vector<64x128xbf16>, vector<8x128xf32> -> vector<8x128xf32>
    %c0_110 = arith.constant 0 : index
    %c0_111 = arith.constant 0 : index
    %96 = vector.load %arg13[%c0_110, %c0_111] : memref<1x128xf32, #tpu.memory_space<vmem>>, vector<1x128xf32>
    %97 = vector.broadcast %96 : vector<1x128xf32> to vector<8x128xf32>
    %98 = arith.addf %95, %97 : vector<8x128xf32>
    %c0_112 = arith.constant 0 : index
    %c0_113 = arith.constant 0 : index
    %99 = vector.load %arg11[%c0_112, %c0_113] : memref<1x128xf32, #tpu.memory_space<vmem>>, vector<1x128xf32>
    %100 = vector.broadcast %99 : vector<1x128xf32> to vector<8x128xf32>
    %101 = arith.addf %98, %100 : vector<8x128xf32>
    %c0_114 = arith.constant 0 : index
    %c0_115 = arith.constant 0 : index
    %102 = vector.load %arg19[%c0_114, %c0_115] : memref<10x128xbf16, #tpu.memory_space<vmem>>, vector<8x128xbf16>
    %c0_116 = arith.constant 0 : index
    %c0_117 = arith.constant 0 : index
    %c0_118 = arith.constant 0 : index
    %103 = vector.load %arg10[%c0_116, %c0_117, %c0_118] : memref<3x128x128xbf16, #tpu.memory_space<vmem>>, vector<1x128x128xbf16>
    %104 = vector.shape_cast %103 : vector<1x128x128xbf16> to vector<128x128xbf16>
    %cst_119 = arith.constant dense<0.000000e+00> : vector<8x128xf32>
    %105 = tpu.matmul %102, %104, %cst_119 {dimension_numbers = #tpu.dot_dimension_numbers<[1], [0], [0], [1], [0, 0, 1, 1], [], []>} : vector<8x128xbf16>, vector<128x128xbf16>, vector<8x128xf32> -> vector<8x128xf32>
    %106 = arith.addf %101, %105 : vector<8x128xf32>
    %c1_120 = arith.constant 1 : index
    %c0_121 = arith.constant 0 : index
    %107 = vector.load %arg19[%c1_120, %c0_121] : memref<10x128xbf16, #tpu.memory_space<vmem>>, vector<8x128xbf16>
    %c1_122 = arith.constant 1 : index
    %c0_123 = arith.constant 0 : index
    %c0_124 = arith.constant 0 : index
    %108 = vector.load %arg10[%c1_122, %c0_123, %c0_124] : memref<3x128x128xbf16, #tpu.memory_space<vmem>>, vector<1x128x128xbf16>
    %109 = vector.shape_cast %108 : vector<1x128x128xbf16> to vector<128x128xbf16>
    %cst_125 = arith.constant dense<0.000000e+00> : vector<8x128xf32>
    %110 = tpu.matmul %107, %109, %cst_125 {dimension_numbers = #tpu.dot_dimension_numbers<[1], [0], [0], [1], [0, 0, 1, 1], [], []>} : vector<8x128xbf16>, vector<128x128xbf16>, vector<8x128xf32> -> vector<8x128xf32>
    %111 = arith.addf %106, %110 : vector<8x128xf32>
    %c2_126 = arith.constant 2 : index
    %c0_127 = arith.constant 0 : index
    %112 = vector.load %arg19[%c2_126, %c0_127] : memref<10x128xbf16, #tpu.memory_space<vmem>>, vector<8x128xbf16>
    %c2_128 = arith.constant 2 : index
    %c0_129 = arith.constant 0 : index
    %c0_130 = arith.constant 0 : index
    %113 = vector.load %arg10[%c2_128, %c0_129, %c0_130] : memref<3x128x128xbf16, #tpu.memory_space<vmem>>, vector<1x128x128xbf16>
    %114 = vector.shape_cast %113 : vector<1x128x128xbf16> to vector<128x128xbf16>
    %cst_131 = arith.constant dense<0.000000e+00> : vector<8x128xf32>
    %115 = tpu.matmul %112, %114, %cst_131 {dimension_numbers = #tpu.dot_dimension_numbers<[1], [0], [0], [1], [0, 0, 1, 1], [], []>} : vector<8x128xbf16>, vector<128x128xbf16>, vector<8x128xf32> -> vector<8x128xf32>
    %116 = arith.addf %111, %115 : vector<8x128xf32>
    %cst_132 = arith.constant 0.000000e+00 : f32
    %117 = vector.broadcast %cst_132 : f32 to vector<8x128xf32>
    %118 = arith.maximumf %116, %117 : vector<8x128xf32>
    %c0_133 = arith.constant 0 : index
    %c0_134 = arith.constant 0 : index
    %119 = vector.load %arg20[%c0_133, %c0_134] : memref<8x128xf32, #tpu.memory_space<vmem>>, vector<8x128xf32>
    tpu.vector_store %arg20[%c0_133, %c0_134], %118 {strides = array<i32>} : memref<8x128xf32, #tpu.memory_space<vmem>>, vector<8x128xf32>,
    %c0_135 = arith.constant 0 : index
    %c0_136 = arith.constant 0 : index
    %120 = tpu.strided_load %arg20[%c0_135, %c0_136] {strides = array<i32: 2, 1>} : memref<8x128xf32, #tpu.memory_space<vmem>>, vector<4x128xf32>
    %c1_137 = arith.constant 1 : index
    %c0_138 = arith.constant 0 : index
    %121 = tpu.strided_load %arg20[%c1_137, %c0_138] {strides = array<i32: 2, 1>} : memref<8x128xf32, #tpu.memory_space<vmem>>, vector<4x128xf32>
    %122 = arith.maximumf %120, %121 : vector<4x128xf32>
    %123 = arith.truncf %122 : vector<4x128xf32> to vector<4x128xbf16>
    %c0_139 = arith.constant 0 : index
    %c0_140 = arith.constant 0 : index
    %c0_141 = arith.constant 0 : index
    %124 = vector.load %arg14[%c0_139, %c0_140, %c0_141] : memref<1x4x128xbf16, #tpu.memory_space<vmem>>, vector<1x4x128xbf16>
    %125 = vector.shape_cast %124 : vector<1x4x128xbf16> to vector<4x128xbf16>
    %126 = vector.shape_cast %123 : vector<4x128xbf16> to vector<1x4x128xbf16>
    tpu.vector_store %arg14[%c0_139, %c0_140, %c0_141], %126 {strides = array<i32>} : memref<1x4x128xbf16, #tpu.memory_space<vmem>>, vector<1x4x128xbf16>,
    return
  }
  func.func @transform_0(%arg0: i32) -> (i32, i32, i32) {
    %c0_i32 = arith.constant 0 : i32
    %c0_i32_0 = arith.constant 0 : i32
    %c0_i32_1 = arith.constant 0 : i32
    return %arg0, %c0_i32, %c0_i32_0 : i32, i32, i32
  }
  func.func @transform_1(%arg0: i32) -> (i32, i32, i32) {
    %c0_i32 = arith.constant 0 : i32
    %c0_i32_0 = arith.constant 0 : i32
    %c0_i32_1 = arith.constant 0 : i32
    %c0_i32_2 = arith.constant 0 : i32
    return %c0_i32, %c0_i32_0, %c0_i32_1 : i32, i32, i32
  }
  func.func @transform_2(%arg0: i32) -> (i32, i32) {
    %c0_i32 = arith.constant 0 : i32
    %c0_i32_0 = arith.constant 0 : i32
    %c0_i32_1 = arith.constant 0 : i32
    return %c0_i32, %c0_i32_0 : i32, i32
  }
  func.func @transform_3(%arg0: i32) -> (i32, i32, i32) {
    %c0_i32 = arith.constant 0 : i32
    %c0_i32_0 = arith.constant 0 : i32
    %c0_i32_1 = arith.constant 0 : i32
    %c0_i32_2 = arith.constant 0 : i32
    return %c0_i32, %c0_i32_0, %c0_i32_1 : i32, i32, i32
  }
  func.func @transform_4(%arg0: i32) -> (i32, i32) {
    %c0_i32 = arith.constant 0 : i32
    %c0_i32_0 = arith.constant 0 : i32
    %c0_i32_1 = arith.constant 0 : i32
    return %c0_i32, %c0_i32_0 : i32, i32
  }
  func.func @transform_5(%arg0: i32) -> (i32, i32) {
    %c0_i32 = arith.constant 0 : i32
    %c0_i32_0 = arith.constant 0 : i32
    %c0_i32_1 = arith.constant 0 : i32
    return %c0_i32, %c0_i32_0 : i32, i32
  }
  func.func @transform_6(%arg0: i32) -> (i32, i32) {
    %c0_i32 = arith.constant 0 : i32
    %c0_i32_0 = arith.constant 0 : i32
    %c0_i32_1 = arith.constant 0 : i32
    return %c0_i32, %c0_i32_0 : i32, i32
  }
  func.func @transform_7(%arg0: i32) -> (i32, i32, i32) {
    %c0_i32 = arith.constant 0 : i32
    %c0_i32_0 = arith.constant 0 : i32
    %c0_i32_1 = arith.constant 0 : i32
    %c0_i32_2 = arith.constant 0 : i32
    return %c0_i32, %c0_i32_0, %c0_i32_1 : i32, i32, i32
  }
  func.func @transform_8(%arg0: i32) -> (i32, i32) {
    %c0_i32 = arith.constant 0 : i32
    %c0_i32_0 = arith.constant 0 : i32
    %c0_i32_1 = arith.constant 0 : i32
    return %c0_i32, %c0_i32_0 : i32, i32
  }
  func.func @transform_9(%arg0: i32) -> (i32, i32, i32) {
    %c0_i32 = arith.constant 0 : i32
    %c0_i32_0 = arith.constant 0 : i32
    %c0_i32_1 = arith.constant 0 : i32
    %c0_i32_2 = arith.constant 0 : i32
    return %c0_i32, %c0_i32_0, %c0_i32_1 : i32, i32, i32
  }
  func.func @transform_10(%arg0: i32) -> (i32, i32) {
    %c0_i32 = arith.constant 0 : i32
    %c0_i32_0 = arith.constant 0 : i32
    %c0_i32_1 = arith.constant 0 : i32
    return %c0_i32, %c0_i32_0 : i32, i32
  }
  func.func @transform_11(%arg0: i32) -> (i32, i32) {
    %c0_i32 = arith.constant 0 : i32
    %c0_i32_0 = arith.constant 0 : i32
    %c0_i32_1 = arith.constant 0 : i32
    return %c0_i32, %c0_i32_0 : i32, i32
  }
  func.func @transform_12(%arg0: i32) -> (i32, i32) {
    %c0_i32 = arith.constant 0 : i32
    %c0_i32_0 = arith.constant 0 : i32
    %c0_i32_1 = arith.constant 0 : i32
    return %c0_i32, %c0_i32_0 : i32, i32
  }
  func.func @transform_13(%arg0: i32) -> (i32, i32, i32) {
    %c0_i32 = arith.constant 0 : i32
    %c0_i32_0 = arith.constant 0 : i32
    %c0_i32_1 = arith.constant 0 : i32
    return %arg0, %c0_i32, %c0_i32_0 : i32, i32, i32
  }
}

</mosaic_0001>

<llo_original>
// kernel: tile.33
$region0: #{tile.33}
  #allocation0 [shape = 's32[1]{0}', space=sflag, size = 0x4, scoped, tag = 'scoped memory for tile.33']
  %s0 = inlined_call_operand.vmem [shape: f32[4], index: 0, kind: input, shape index: {}]
  %s1 = inlined_call_operand.vmem [shape: f32[16,4], index: 1, kind: output, shape index: {}]
  // Predicated region
  $region2: #{tile.33} parent=0 // pred_check
    _
  $region3: #{tile.33} parent=0 // pred_check_branch
    %3 = sbr.rel (0) target = $region5
  $region4: #{tile.33} parent=0 // pred_region
    _
  $region5: #{tile.33} parent=0 // pred_fallthru
    _
  %v4 = vld [vmem:[%s0] ss:$0 sm:$0xff]
  %5 = vst [vmem:[%s1] sm:$0xff] %v4
  %s6 = scalar_lea.vmem %s1, 8
  %7 = vst [vmem:[%s6] sm:$0xff] %v4

// kernel: tile.34
$region0: #{tile.34}
  %s0 = inlined_call_operand.vmem [shape: f32[16,4], index: 0, kind: input, shape index: {}]
  %s1 = inlined_call_operand.vmem [shape: f32[1,64], index: 1, kind: output, shape index: {}]
  $region1: #{tile.34} parent=0
    #allocation0 [shape = 'u8[4096]{0}', space=vmem, size = 0x1000, scoped, tag = 'scoped mem for output reshape']
    %v2 = vld [vmem:[%s0] sm:$0x1]
    %vm3 = vcmask 31744
    %4 = vst.msk [vmem:[#allocation0] sm:$0x1] %vm3, %v2
    %s5 = scalar_lea.vmem %s0, 15
    %v6 = vld [vmem:[%s5] sm:$0x1]
    %7 = vrot.lane.b32.xlu0 %v6, 60
    %v8 = vpop.permute.xlu0 %7
    %vm9 = vcmask 523744
    %10 = vst.msk [vmem:[#allocation0] sm:$0x1] %vm9, %v8
    %s11 = scalar_lea.vmem %s0, 14
    %v12 = vld [vmem:[%s11] sm:$0x1]
    %13 = vrot.lane.b32.xlu0 %v12, 56
    %v14 = vpop.permute.xlu0 %13
    %vm15 = vcmask 490944
    %16 = vst.msk [vmem:[#allocation0] sm:$0x1] %vm15, %v14
    %s17 = scalar_lea.vmem %s0, 13
    %v18 = vld [vmem:[%s17] sm:$0x1]
    %19 = vrot.lane.b32.xlu0 %v18, 52
    %v20 = vpop.permute.xlu0 %19
    %vm21 = vcmask 458144
    %22 = vst.msk [vmem:[#allocation0] sm:$0x1] %vm21, %v20
    %s23 = scalar_lea.vmem %s0, 12
    %v24 = vld [vmem:[%s23] sm:$0x1]
    %25 = vrot.lane.b32.xlu0 %v24, 48
    %v26 = vpop.permute.xlu0 %25
    %vm27 = vcmask 425344
    %28 = vst.msk [vmem:[#allocation0] sm:$0x1] %vm27, %v26
    %s29 = scalar_lea.vmem %s0, 11
    %v30 = vld [vmem:[%s29] sm:$0x1]
    %31 = vrot.lane.b32.xlu0 %v30, 44
    %v32 = vpop.permute.xlu0 %31
    %vm33 = vcmask 392544
    %34 = vst.msk [vmem:[#allocation0] sm:$0x1] %vm33, %v32
    %s35 = scalar_lea.vmem %s0, 10
    %v36 = vld [vmem:[%s35] sm:$0x1]
    %37 = vrot.lane.b32.xlu0 %v36, 40
    %v38 = vpop.permute.xlu0 %37
    %vm39 = vcmask 359744
    %40 = vst.msk [vmem:[#allocation0] sm:$0x1] %vm39, %v38
    %s41 = scalar_lea.vmem %s0, 9
    %v42 = vld [vmem:[%s41] sm:$0x1]
    %43 = vrot.lane.b32.xlu0 %v42, 36
    %v44 = vpop.permute.xlu0 %43
    %vm45 = vcmask 326944
    %46 = vst.msk [vmem:[#allocation0] sm:$0x1] %vm45, %v44
    %s47 = scalar_lea.vmem %s0, 8
    %v48 = vld [vmem:[%s47] sm:$0x1]
    %49 = vrot.lane.b32.xlu0 %v48, 32
    %v50 = vpop.permute.xlu0 %49
    %vm51 = vcmask 294144
    %52 = vst.msk [vmem:[#allocation0] sm:$0x1] %vm51, %v50
    %s53 = scalar_lea.vmem %s0, 7
    %v54 = vld [vmem:[%s53] sm:$0x1]
    %55 = vrot.lane.b32.xlu0 %v54, 28
    %v56 = vpop.permute.xlu0 %55
    %vm57 = vcmask 261344
    %58 = vst.msk [vmem:[#allocation0] sm:$0x1] %vm57, %v56
    %s59 = scalar_lea.vmem %s0, 6
    %v60 = vld [vmem:[%s59] sm:$0x1]
    %61 = vrot.lane.b32.xlu0 %v60, 24
    %v62 = vpop.permute.xlu0 %61
    %vm63 = vcmask 228544
    %64 = vst.msk [vmem:[#allocation0] sm:$0x1] %vm63, %v62
    %s65 = scalar_lea.vmem %s0, 5
    %v66 = vld [vmem:[%s65] sm:$0x1]
    %67 = vrot.lane.b32.xlu0 %v66, 20
    %v68 = vpop.permute.xlu0 %67
    %vm69 = vcmask 195744
    %70 = vst.msk [vmem:[#allocation0] sm:$0x1] %vm69, %v68
    %s71 = scalar_lea.vmem %s0, 4
    %v72 = vld [vmem:[%s71] sm:$0x1]
    %73 = vrot.lane.b32.xlu0 %v72, 16
    %v74 = vpop.permute.xlu0 %73
    %vm75 = vcmask 162944
    %76 = vst.msk [vmem:[#allocation0] sm:$0x1] %vm75, %v74
    %s77 = scalar_lea.vmem %s0, 3
    %v78 = vld [vmem:[%s77] sm:$0x1]
    %79 = vrot.lane.b32.xlu0 %v78, 12
    %v80 = vpop.permute.xlu0 %79
    %vm81 = vcmask 130144
    %82 = vst.msk [vmem:[#allocation0] sm:$0x1] %vm81, %v80
    %s83 = scalar_lea.vmem %s0, 2
    %v84 = vld [vmem:[%s83] sm:$0x1]
    %85 = vrot.lane.b32.xlu0 %v84, 8
    %v86 = vpop.permute.xlu0 %85
    %vm87 = vcmask 97344
    %88 = vst.msk [vmem:[#allocation0] sm:$0x1] %vm87, %v86
    %s89 = scalar_lea.vmem %s0, 1
    %v90 = vld [vmem:[%s89] sm:$0x1]
    %91 = vrot.lane.b32.xlu0 %v90, 4
    %v92 = vpop.permute.xlu0 %91
    %vm93 = vcmask 64544
    %94 = vst.msk [vmem:[#allocation0] sm:$0x1] %vm93, %v92
    %s96 = sshllo.u32 0, 1
    %v98 = vld [vmem:[#allocation0] sm:%s96]
    %s99 = sshllo.u32 0, 1
    %100 = vst [vmem:[%s1] sm:%s99] %v98

// kernel: tile.48
$region0: #{tile.48}
  #allocation0 [shape = 's32[1]{0}', space=sflag, size = 0x4, scoped, tag = 'scoped memory for tile.48']
  %s0 = inlined_call_operand.vmem [shape: f32[8], index: 0, kind: input, shape index: {}]
  %s1 = inlined_call_operand.vmem [shape: f32[16,8], index: 1, kind: output, shape index: {}]
  // Predicated region
  $region2: #{tile.48} parent=0 // pred_check
    _
  $region3: #{tile.48} parent=0 // pred_check_branch
    %3 = sbr.rel (0) target = $region5
  $region4: #{tile.48} parent=0 // pred_region
    _
  $region5: #{tile.48} parent=0 // pred_fallthru
    _
  %v4 = vld [vmem:[%s0] ss:$0 sm:$0xff]
  %5 = vst [vmem:[%s1] sm:$0xff] %v4
  %s6 = scalar_lea.vmem %s1, 8
  %7 = vst [vmem:[%s6] sm:$0xff] %v4

// kernel: tile.49
$region0: #{tile.49}
  %s0 = inlined_call_operand.vmem [shape: f32[16,8], index: 0, kind: input, shape index: {}]
  %s1 = inlined_call_operand.vmem [shape: f32[1,128], index: 1, kind: output, shape index: {}]
  $region1: #{tile.49} parent=0
    #allocation0 [shape = 'u8[4096]{0}', space=vmem, size = 0x1000, scoped, tag = 'scoped mem for output reshape']
    %v2 = vld [vmem:[%s0] sm:$0x1]
    %vm3 = vcmask 64512
    %4 = vst.msk [vmem:[#allocation0] sm:$0x1] %vm3, %v2
    %s5 = scalar_lea.vmem %s0, 15
    %v6 = vld [vmem:[%s5] sm:$0x1]
    %7 = vrot.lane.b32.xlu0 %v6, 120
    %v8 = vpop.permute.xlu0 %7
    %vm9 = vcmask 1048512
    %10 = vst.msk [vmem:[#allocation0] sm:$0x1] %vm9, %v8
    %s11 = scalar_lea.vmem %s0, 14
    %v12 = vld [vmem:[%s11] sm:$0x1]
    %13 = vrot.lane.b32.xlu0 %v12, 112
    %v14 = vpop.permute.xlu0 %13
    %vm15 = vcmask 982912
    %16 = vst.msk [vmem:[#allocation0] sm:$0x1] %vm15, %v14
    %s17 = scalar_lea.vmem %s0, 13
    %v18 = vld [vmem:[%s17] sm:$0x1]
    %19 = vrot.lane.b32.xlu0 %v18, 104
    %v20 = vpop.permute.xlu0 %19
    %vm21 = vcmask 917312
    %22 = vst.msk [vmem:[#allocation0] sm:$0x1] %vm21, %v20
    %s23 = scalar_lea.vmem %s0, 12
    %v24 = vld [vmem:[%s23] sm:$0x1]
    %25 = vrot.lane.b32.xlu0 %v24, 96
    %v26 = vpop.permute.xlu0 %25
    %vm27 = vcmask 851712
    %28 = vst.msk [vmem:[#allocation0] sm:$0x1] %vm27, %v26
    %s29 = scalar_lea.vmem %s0, 11
    %v30 = vld [vmem:[%s29] sm:$0x1]
    %31 = vrot.lane.b32.xlu0 %v30, 88
    %v32 = vpop.permute.xlu0 %31
    %vm33 = vcmask 786112
    %34 = vst.msk [vmem:[#allocation0] sm:$0x1] %vm33, %v32
    %s35 = scalar_lea.vmem %s0, 10
    %v36 = vld [vmem:[%s35] sm:$0x1]
    %37 = vrot.lane.b32.xlu0 %v36, 80
    %v38 = vpop.permute.xlu0 %37
    %vm39 = vcmask 720512
    %40 = vst.msk [vmem:[#allocation0] sm:$0x1] %vm39, %v38
    %s41 = scalar_lea.vmem %s0, 9
    %v42 = vld [vmem:[%s41] sm:$0x1]
    %43 = vrot.lane.b32.xlu0 %v42, 72
    %v44 = vpop.permute.xlu0 %43
    %vm45 = vcmask 654912
    %46 = vst.msk [vmem:[#allocation0] sm:$0x1] %vm45, %v44
    %s47 = scalar_lea.vmem %s0, 8
    %v48 = vld [vmem:[%s47] sm:$0x1]
    %49 = vrot.lane.b32.xlu0 %v48, 64
    %v50 = vpop.permute.xlu0 %49
    %vm51 = vcmask 589312
    %52 = vst.msk [vmem:[#allocation0] sm:$0x1] %vm51, %v50
    %s53 = scalar_lea.vmem %s0, 7
    %v54 = vld [vmem:[%s53] sm:$0x1]
    %55 = vrot.lane.b32.xlu0 %v54, 56
    %v56 = vpop.permute.xlu0 %55
    %vm57 = vcmask 523712
    %58 = vst.msk [vmem:[#allocation0] sm:$0x1] %vm57, %v56
    %s59 = scalar_lea.vmem %s0, 6
    %v60 = vld [vmem:[%s59] sm:$0x1]
    %61 = vrot.lane.b32.xlu0 %v60, 48
    %v62 = vpop.permute.xlu0 %61
    %vm63 = vcmask 458112
    %64 = vst.msk [vmem:[#allocation0] sm:$0x1] %vm63, %v62
    %s65 = scalar_lea.vmem %s0, 5
    %v66 = vld [vmem:[%s65] sm:$0x1]
    %67 = vrot.lane.b32.xlu0 %v66, 40
    %v68 = vpop.permute.xlu0 %67
    %vm69 = vcmask 392512
    %70 = vst.msk [vmem:[#allocation0] sm:$0x1] %vm69, %v68
    %s71 = scalar_lea.vmem %s0, 4
    %v72 = vld [vmem:[%s71] sm:$0x1]
    %73 = vrot.lane.b32.xlu0 %v72, 32
    %v74 = vpop.permute.xlu0 %73
    %vm75 = vcmask 326912
    %76 = vst.msk [vmem:[#allocation0] sm:$0x1] %vm75, %v74
    %s77 = scalar_lea.vmem %s0, 3
    %v78 = vld [vmem:[%s77] sm:$0x1]
    %79 = vrot.lane.b32.xlu0 %v78, 24
    %v80 = vpop.permute.xlu0 %79
    %vm81 = vcmask 261312
    %82 = vst.msk [vmem:[#allocation0] sm:$0x1] %vm81, %v80
    %s83 = scalar_lea.vmem %s0, 2
    %v84 = vld [vmem:[%s83] sm:$0x1]
    %85 = vrot.lane.b32.xlu0 %v84, 16
    %v86 = vpop.permute.xlu0 %85
    %vm87 = vcmask 195712
    %88 = vst.msk [vmem:[#allocation0] sm:$0x1] %vm87, %v86
    %s89 = scalar_lea.vmem %s0, 1
    %v90 = vld [vmem:[%s89] sm:$0x1]
    %91 = vrot.lane.b32.xlu0 %v90, 8
    %v92 = vpop.permute.xlu0 %91
    %vm93 = vcmask 130112
    %94 = vst.msk [vmem:[#allocation0] sm:$0x1] %vm93, %v92
    %s96 = sshllo.u32 0, 1
    %v98 = vld [vmem:[#allocation0] sm:%s96]
    %s99 = sshllo.u32 0, 1
    %100 = vst [vmem:[%s1] sm:%s99] %v98

// kernel: cnn_feature_forward.1
$region0: #{cnn_feature_forward.1}
  #allocation0 [shape = 'u32[]', space=smem, size = 0x4, offset = 0x4, fixed_abs, tag = 'smem constant byte address 0x4 - core index']
  #allocation1 [shape = 'u32[144,128]{1,0:T(1,128)}', space=vmem, size = 0x12000, scoped, tag = 'internal scratch']
  #allocation2 [shape = 'bf16[18,16]{1,0:T(8,128)(2,1)}', space=vmem, size = 0x1800, scoped, tag = 'scratch operand']
  #allocation3 [shape = 'bf16[18,64]{1,0:T(8,128)(2,1)}', space=vmem, size = 0x1800, scoped, tag = 'scratch operand']
  #allocation4 [shape = 'f32[16,64]{1,0:T(8,128)}', space=vmem, size = 0x2000, scoped, tag = 'scratch operand']
  #allocation5 [shape = 'bf16[10,64]{1,0:T(8,128)(2,1)}', space=vmem, size = 0x1000, scoped, tag = 'scratch operand']
  #allocation6 [shape = 'bf16[10,128]{1,0:T(8,128)(2,1)}', space=vmem, size = 0x1000, scoped, tag = 'scratch operand']
  #allocation7 [shape = 'f32[8,128]{1,0:T(8,128)}', space=vmem, size = 0x1000, scoped, tag = 'scratch operand']
  %s0 = inlined_call_operand.vmem [shape: bf16[2,16,16], index: 0, kind: input, shape index: {}]
  %s1 = inlined_call_operand.vmem [shape: bf16[3,16,64], index: 1, kind: input, shape index: {}]
  %s2 = inlined_call_operand.vmem [shape: f32[1,64], index: 2, kind: input, shape index: {}]
  %s3 = inlined_call_operand.vmem [shape: bf16[3,64,64], index: 3, kind: input, shape index: {}]
  %s4 = inlined_call_operand.vmem [shape: f32[1,64], index: 4, kind: input, shape index: {}]
  %s5 = inlined_call_operand.vmem [shape: bf16[16,64], index: 5, kind: input, shape index: {}]
  %s6 = inlined_call_operand.vmem [shape: f32[1,64], index: 6, kind: input, shape index: {}]
  %s7 = inlined_call_operand.vmem [shape: bf16[3,64,128], index: 7, kind: input, shape index: {}]
  %s8 = inlined_call_operand.vmem [shape: f32[1,128], index: 8, kind: input, shape index: {}]
  %s9 = inlined_call_operand.vmem [shape: bf16[3,128,128], index: 9, kind: input, shape index: {}]
  %s10 = inlined_call_operand.vmem [shape: f32[1,128], index: 10, kind: input, shape index: {}]
  %s11 = inlined_call_operand.vmem [shape: bf16[64,128], index: 11, kind: input, shape index: {}]
  %s12 = inlined_call_operand.vmem [shape: f32[1,128], index: 12, kind: input, shape index: {}]
  %s13 = inlined_call_operand.vmem [shape: bf16[2,4,128], index: 13, kind: output, shape index: {}]
  %s14 = sld [smem:[#allocation0]]
  $region85: #{cnn_feature_forward.1} parent=0
    _
  %s16 = ssub.s32 1, %s14
  %s17 = scalar_select 0, %s16, %s14
  loop: start=0, step=1, limit=4
  $region2: #{cnn_feature_forward.1} parent=0 // loop_pre_header
    _
  $region3: #{cnn_feature_forward.1} parent=0 // loop_header
    %s19 = sphi 0, %s23
    %p20 = scmp.ge.s32.totalorder %s19, 4
    %s29 = sphi 0, %s31
    %s32 = sphi 0, %s29
    %s33 = sphi 0, %s32
    %s49 = sphi 0, %s33
    %s53 = sphi 0, %s53
    %s55 = sphi 0, %s53
    %s56 = sphi 0, %s55
    %s70 = sphi 0, %s56
    %s74 = sphi 0, %s74
    %s76 = sphi 0, %s74
    %s77 = sphi 0, %s76
    %s91 = sphi 0, %s77
    %s95 = sphi 0, %s95
    %s97 = sphi 0, %s95
    %s98 = sphi 0, %s97
    %s112 = sphi 0, %s98
    %s116 = sphi 0, %s116
    %s118 = sphi 0, %s116
    %s119 = sphi 0, %s118
    %s133 = sphi 0, %s119
    %s137 = sphi 0, %s137
    %s139 = sphi 0, %s137
    %s140 = sphi 0, %s139
    %s154 = sphi 0, %s140
    %s158 = sphi 0, %s158
    %s160 = sphi 0, %s158
    %s161 = sphi 0, %s160
    %s175 = sphi 0, %s161
    %s179 = sphi 0, %s179
    %s181 = sphi 0, %s179
    %s182 = sphi 0, %s181
    %s196 = sphi 0, %s182
    %s200 = sphi 0, %s200
    %s202 = sphi 0, %s200
    %s203 = sphi 0, %s202
    %s217 = sphi 0, %s203
    %s221 = sphi 0, %s221
    %s223 = sphi 0, %s221
    %s224 = sphi 0, %s223
    %s238 = sphi 0, %s224
    %s242 = sphi 0, %s242
    %s244 = sphi 0, %s242
    %s245 = sphi 0, %s244
    %s259 = sphi 0, %s245
    %s263 = sphi 0, %s263
    %s265 = sphi 0, %s263
    %s266 = sphi 0, %s265
    %s280 = sphi 0, %s266
    %s284 = sphi 0, %s284
    %s286 = sphi 0, %s284
    %s287 = sphi 0, %s286
    %s301 = sphi 0, %s287
    %s307 = sphi 0, %s309
    %s310 = sphi 0, %s307
    %s311 = sphi 0, %s310
    %s327 = sphi 0, %s311
  $region4: #{cnn_feature_forward.1} parent=0 // loop_header_branch
    %22 = sbr.rel (%p20) target = $region8
  $region5: #{cnn_feature_forward.1} parent=0 // loop_body
    %s24 = ssub.s32 %s19, 1
    %s25 = ssub.s32 %s19, 2
    %s26 = sadd.s32 %s19, 1
    %s27 = ssub.s32 %s19, %s26
    %p28 = scmp.eq.s32.totalorder %s27, 0
    %s30 = sadd.s32 %s29, 1
    %s31 = scalar_select %p28, %s29, %s30
    %p34 = pneg %p28
    %p35 = scmp.eq.s32.totalorder %s19, 1
    %p36 = por %p34, %p35
    %p37 = scmp.ne.s32.totalorder %s29, %s32
    %p38 = scmp.eq.s32.totalorder %s19, 0
    %p39 = por %p37, %p38
    %p40 = scmp.ne.s32.totalorder %s29, %s32
    %p41 = scmp.eq.s32.totalorder %s24, 1
    %p42 = por %p40, %p41
    %p43 = scmp.ne.s32.totalorder %s32, %s33
    %p44 = scmp.eq.s32.totalorder %s24, 0
    %p45 = por %p43, %p44
    %p46 = scmp.ne.s32.totalorder %s32, %s33
    %p47 = scmp.eq.s32.totalorder %s25, 1
    %p48 = por %p46, %p47
    %p50 = scmp.ne.s32.totalorder %s33, %s49
    %p51 = scmp.eq.s32.totalorder %s25, 0
    %p52 = por %p50, %p51
    %s54 = sadd.s32 %s53, 1
    %p57 = scmp.eq.s32.totalorder %s19, 1
    %p58 = scmp.ne.s32.totalorder %s53, %s55
    %p59 = scmp.eq.s32.totalorder %s19, 0
    %p60 = por %p58, %p59
    %p61 = scmp.ne.s32.totalorder %s53, %s55
    %p62 = scmp.eq.s32.totalorder %s24, 1
    %p63 = por %p61, %p62
    %p64 = scmp.ne.s32.totalorder %s55, %s56
    %p65 = scmp.eq.s32.totalorder %s24, 0
    %p66 = por %p64, %p65
    %p67 = scmp.ne.s32.totalorder %s55, %s56
    %p68 = scmp.eq.s32.totalorder %s25, 1
    %p69 = por %p67, %p68
    %p71 = scmp.ne.s32.totalorder %s56, %s70
    %p72 = scmp.eq.s32.totalorder %s25, 0
    %p73 = por %p71, %p72
    %s75 = sadd.s32 %s74, 1
    %p78 = scmp.eq.s32.totalorder %s19, 1
    %p79 = scmp.ne.s32.totalorder %s74, %s76
    %p80 = scmp.eq.s32.totalorder %s19, 0
    %p81 = por %p79, %p80
    %p82 = scmp.ne.s32.totalorder %s74, %s76
    %p83 = scmp.eq.s32.totalorder %s24, 1
    %p84 = por %p82, %p83
    %p85 = scmp.ne.s32.totalorder %s76, %s77
    %p86 = scmp.eq.s32.totalorder %s24, 0
    %p87 = por %p85, %p86
    %p88 = scmp.ne.s32.totalorder %s76, %s77
    %p89 = scmp.eq.s32.totalorder %s25, 1
    %p90 = por %p88, %p89
    %p92 = scmp.ne.s32.totalorder %s77, %s91
    %p93 = scmp.eq.s32.totalorder %s25, 0
    %p94 = por %p92, %p93
    %s96 = sadd.s32 %s95, 1
    %p99 = scmp.eq.s32.totalorder %s19, 1
    %p100 = scmp.ne.s32.totalorder %s95, %s97
    %p101 = scmp.eq.s32.totalorder %s19, 0
    %p102 = por %p100, %p101
    %p103 = scmp.ne.s32.totalorder %s95, %s97
    %p104 = scmp.eq.s32.totalorder %s24, 1
    %p105 = por %p103, %p104
    %p106 = scmp.ne.s32.totalorder %s97, %s98
    %p107 = scmp.eq.s32.totalorder %s24, 0
    %p108 = por %p106, %p107
    %p109 = scmp.ne.s32.totalorder %s97, %s98
    %p110 = scmp.eq.s32.totalorder %s25, 1
    %p111 = por %p109, %p110
    %p113 = scmp.ne.s32.totalorder %s98, %s112
    %p114 = scmp.eq.s32.totalorder %s25, 0
    %p115 = por %p113, %p114
    %s117 = sadd.s32 %s116, 1
    %p120 = scmp.eq.s32.totalorder %s19, 1
    %p121 = scmp.ne.s32.totalorder %s116, %s118
    %p122 = scmp.eq.s32.totalorder %s19, 0
    %p123 = por %p121, %p122
    %p124 = scmp.ne.s32.totalorder %s116, %s118
    %p125 = scmp.eq.s32.totalorder %s24, 1
    %p126 = por %p124, %p125
    %p127 = scmp.ne.s32.totalorder %s118, %s119
    %p128 = scmp.eq.s32.totalorder %s24, 0
    %p129 = por %p127, %p128
    %p130 = scmp.ne.s32.totalorder %s118, %s119
    %p131 = scmp.eq.s32.totalorder %s25, 1
    %p132 = por %p130, %p131
    %p134 = scmp.ne.s32.totalorder %s119, %s133
    %p135 = scmp.eq.s32.totalorder %s25, 0
    %p136 = por %p134, %p135
    %s138 = sadd.s32 %s137, 1
    %p141 = scmp.eq.s32.totalorder %s19, 1
    %p142 = scmp.ne.s32.totalorder %s137, %s139
    %p143 = scmp.eq.s32.totalorder %s19, 0
    %p144 = por %p142, %p143
    %p145 = scmp.ne.s32.totalorder %s137, %s139
    %p146 = scmp.eq.s32.totalorder %s24, 1
    %p147 = por %p145, %p146
    %p148 = scmp.ne.s32.totalorder %s139, %s140
    %p149 = scmp.eq.s32.totalorder %s24, 0
    %p150 = por %p148, %p149
    %p151 = scmp.ne.s32.totalorder %s139, %s140
    %p152 = scmp.eq.s32.totalorder %s25, 1
    %p153 = por %p151, %p152
    %p155 = scmp.ne.s32.totalorder %s140, %s154
    %p156 = scmp.eq.s32.totalorder %s25, 0
    %p157 = por %p155, %p156
    %s159 = sadd.s32 %s158, 1
    %p162 = scmp.eq.s32.totalorder %s19, 1
    %p163 = scmp.ne.s32.totalorder %s158, %s160
    %p164 = scmp.eq.s32.totalorder %s19, 0
    %p165 = por %p163, %p164
    %p166 = scmp.ne.s32.totalorder %s158, %s160
    %p167 = scmp.eq.s32.totalorder %s24, 1
    %p168 = por %p166, %p167
    %p169 = scmp.ne.s32.totalorder %s160, %s161
    %p170 = scmp.eq.s32.totalorder %s24, 0
    %p171 = por %p169, %p170
    %p172 = scmp.ne.s32.totalorder %s160, %s161
    %p173 = scmp.eq.s32.totalorder %s25, 1
    %p174 = por %p172, %p173
    %p176 = scmp.ne.s32.totalorder %s161, %s175
    %p177 = scmp.eq.s32.totalorder %s25, 0
    %p178 = por %p176, %p177
    %s180 = sadd.s32 %s179, 1
    %p183 = scmp.eq.s32.totalorder %s19, 1
    %p184 = scmp.ne.s32.totalorder %s179, %s181
    %p185 = scmp.eq.s32.totalorder %s19, 0
    %p186 = por %p184, %p185
    %p187 = scmp.ne.s32.totalorder %s179, %s181
    %p188 = scmp.eq.s32.totalorder %s24, 1
    %p189 = por %p187, %p188
    %p190 = scmp.ne.s32.totalorder %s181, %s182
    %p191 = scmp.eq.s32.totalorder %s24, 0
    %p192 = por %p190, %p191
    %p193 = scmp.ne.s32.totalorder %s181, %s182
    %p194 = scmp.eq.s32.totalorder %s25, 1
    %p195 = por %p193, %p194
    %p197 = scmp.ne.s32.totalorder %s182, %s196
    %p198 = scmp.eq.s32.totalorder %s25, 0
    %p199 = por %p197, %p198
    %s201 = sadd.s32 %s200, 1
    %p204 = scmp.eq.s32.totalorder %s19, 1
    %p205 = scmp.ne.s32.totalorder %s200, %s202
    %p206 = scmp.eq.s32.totalorder %s19, 0
    %p207 = por %p205, %p206
    %p208 = scmp.ne.s32.totalorder %s200, %s202
    %p209 = scmp.eq.s32.totalorder %s24, 1
    %p210 = por %p208, %p209
    %p211 = scmp.ne.s32.totalorder %s202, %s203
    %p212 = scmp.eq.s32.totalorder %s24, 0
    %p213 = por %p211, %p212
    %p214 = scmp.ne.s32.totalorder %s202, %s203
    %p215 = scmp.eq.s32.totalorder %s25, 1
    %p216 = por %p214, %p215
    %p218 = scmp.ne.s32.totalorder %s203, %s217
    %p219 = scmp.eq.s32.totalorder %s25, 0
    %p220 = por %p218, %p219
    %s222 = sadd.s32 %s221, 1
    %p225 = scmp.eq.s32.totalorder %s19, 1
    %p226 = scmp.ne.s32.totalorder %s221, %s223
    %p227 = scmp.eq.s32.totalorder %s19, 0
    %p228 = por %p226, %p227
    %p229 = scmp.ne.s32.totalorder %s221, %s223
    %p230 = scmp.eq.s32.totalorder %s24, 1
    %p231 = por %p229, %p230
    %p232 = scmp.ne.s32.totalorder %s223, %s224
    %p233 = scmp.eq.s32.totalorder %s24, 0
    %p234 = por %p232, %p233
    %p235 = scmp.ne.s32.totalorder %s223, %s224
    %p236 = scmp.eq.s32.totalorder %s25, 1
    %p237 = por %p235, %p236
    %p239 = scmp.ne.s32.totalorder %s224, %s238
    %p240 = scmp.eq.s32.totalorder %s25, 0
    %p241 = por %p239, %p240
    %s243 = sadd.s32 %s242, 1
    %p246 = scmp.eq.s32.totalorder %s19, 1
    %p247 = scmp.ne.s32.totalorder %s242, %s244
    %p248 = scmp.eq.s32.totalorder %s19, 0
    %p249 = por %p247, %p248
    %p250 = scmp.ne.s32.totalorder %s242, %s244
    %p251 = scmp.eq.s32.totalorder %s24, 1
    %p252 = por %p250, %p251
    %p253 = scmp.ne.s32.totalorder %s244, %s245
    %p254 = scmp.eq.s32.totalorder %s24, 0
    %p255 = por %p253, %p254
    %p256 = scmp.ne.s32.totalorder %s244, %s245
    %p257 = scmp.eq.s32.totalorder %s25, 1
    %p258 = por %p256, %p257
    %p260 = scmp.ne.s32.totalorder %s245, %s259
    %p261 = scmp.eq.s32.totalorder %s25, 0
    %p262 = por %p260, %p261
    %s264 = sadd.s32 %s263, 1
    %p267 = scmp.eq.s32.totalorder %s19, 1
    %p268 = scmp.ne.s32.totalorder %s263, %s265
    %p269 = scmp.eq.s32.totalorder %s19, 0
    %p270 = por %p268, %p269
    %p271 = scmp.ne.s32.totalorder %s263, %s265
    %p272 = scmp.eq.s32.totalorder %s24, 1
    %p273 = por %p271, %p272
    %p274 = scmp.ne.s32.totalorder %s265, %s266
    %p275 = scmp.eq.s32.totalorder %s24, 0
    %p276 = por %p274, %p275
    %p277 = scmp.ne.s32.totalorder %s265, %s266
    %p278 = scmp.eq.s32.totalorder %s25, 1
    %p279 = por %p277, %p278
    %p281 = scmp.ne.s32.totalorder %s266, %s280
    %p282 = scmp.eq.s32.totalorder %s25, 0
    %p283 = por %p281, %p282
    %s285 = sadd.s32 %s284, 1
    %p288 = scmp.eq.s32.totalorder %s19, 1
    %p289 = scmp.ne.s32.totalorder %s284, %s286
    %p290 = scmp.eq.s32.totalorder %s19, 0
    %p291 = por %p289, %p290
    %p292 = scmp.ne.s32.totalorder %s284, %s286
    %p293 = scmp.eq.s32.totalorder %s24, 1
    %p294 = por %p292, %p293
    %p295 = scmp.ne.s32.totalorder %s286, %s287
    %p296 = scmp.eq.s32.totalorder %s24, 0
    %p297 = por %p295, %p296
    %p298 = scmp.ne.s32.totalorder %s286, %s287
    %p299 = scmp.eq.s32.totalorder %s25, 1
    %p300 = por %p298, %p299
    %p302 = scmp.ne.s32.totalorder %s287, %s301
    %p303 = scmp.eq.s32.totalorder %s25, 0
    %p304 = por %p302, %p303
    %s305 = ssub.s32 %s19, %s26
    %p306 = scmp.eq.s32.totalorder %s305, 0
    %s308 = sadd.s32 %s307, 1
    %s309 = scalar_select %p306, %s307, %s308
    %p312 = pneg %p306
    %p313 = scmp.eq.s32.totalorder %s19, 1
    %p314 = por %p312, %p313
    %p315 = scmp.ne.s32.totalorder %s307, %s310
    %p316 = scmp.eq.s32.totalorder %s19, 0
    %p317 = por %p315, %p316
    %p318 = scmp.ne.s32.totalorder %s307, %s310
    %p319 = scmp.eq.s32.totalorder %s24, 1
    %p320 = por %p318, %p319
    %p321 = scmp.ne.s32.totalorder %s310, %s311
    %p322 = scmp.eq.s32.totalorder %s24, 0
    %p323 = por %p321, %p322
    %p324 = scmp.ne.s32.totalorder %s310, %s311
    %p325 = scmp.eq.s32.totalorder %s25, 1
    %p326 = por %p324, %p325
    %p328 = scmp.ne.s32.totalorder %s311, %s327
    %p329 = scmp.eq.s32.totalorder %s25, 0
    %p330 = por %p328, %p329
    %p331 = scmp.le.s32.totalorder 1, %s19
    %p332 = scmp.lt.s32.totalorder %s19, 3
    %p333 = pnand %p331, %p332
    %p334 = pneg %p333
    // Predicated region
    $region9: #{cnn_feature_forward.1} parent=5 // pred_check
      _
    $region10: #{cnn_feature_forward.1} parent=5 // pred_check_branch
      %336 = sbr.rel (%p333) target = $region12
    $region11: #{cnn_feature_forward.1} parent=5 // pred_region
      %s337 = ssub.s32 %s19, 1
      // Predicated region
      $region13: #{cnn_feature_forward.1} parent=11 // pred_check
        %p338 = pneg %p66
      $region14: #{cnn_feature_forward.1} parent=11 // pred_check_branch
        %340 = sbr.rel (%p338) target = $region16
      $region15: #{cnn_feature_forward.1} parent=11 // pred_region
        _
      $region16: #{cnn_feature_forward.1} parent=11 // pred_fallthru
        _
      // Predicated region
      $region17: #{cnn_feature_forward.1} parent=11 // pred_check
        %p341 = pneg %p87
      $region18: #{cnn_feature_forward.1} parent=11 // pred_check_branch
        %343 = sbr.rel (%p341) target = $region20
      $region19: #{cnn_feature_forward.1} parent=11 // pred_region
        _
      $region20: #{cnn_feature_forward.1} parent=11 // pred_fallthru
        _
      // Predicated region
      $region21: #{cnn_feature_forward.1} parent=11 // pred_check
        %p344 = pneg %p108
      $region22: #{cnn_feature_forward.1} parent=11 // pred_check_branch
        %346 = sbr.rel (%p344) target = $region24
      $region23: #{cnn_feature_forward.1} parent=11 // pred_region
        _
      $region24: #{cnn_feature_forward.1} parent=11 // pred_fallthru
        _
      // Predicated region
      $region25: #{cnn_feature_forward.1} parent=11 // pred_check
        %p347 = pneg %p129
      $region26: #{cnn_feature_forward.1} parent=11 // pred_check_branch
        %349 = sbr.rel (%p347) target = $region28
      $region27: #{cnn_feature_forward.1} parent=11 // pred_region
        _
      $region28: #{cnn_feature_forward.1} parent=11 // pred_fallthru
        _
      // Predicated region
      $region29: #{cnn_feature_forward.1} parent=11 // pred_check
        %p350 = pneg %p150
      $region30: #{cnn_feature_forward.1} parent=11 // pred_check_branch
        %352 = sbr.rel (%p350) target = $region32
      $region31: #{cnn_feature_forward.1} parent=11 // pred_region
        _
      $region32: #{cnn_feature_forward.1} parent=11 // pred_fallthru
        _
      // Predicated region
      $region33: #{cnn_feature_forward.1} parent=11 // pred_check
        %p353 = pneg %p171
      $region34: #{cnn_feature_forward.1} parent=11 // pred_check_branch
        %355 = sbr.rel (%p353) target = $region36
      $region35: #{cnn_feature_forward.1} parent=11 // pred_region
        _
      $region36: #{cnn_feature_forward.1} parent=11 // pred_fallthru
        _
      // Predicated region
      $region37: #{cnn_feature_forward.1} parent=11 // pred_check
        %p356 = pneg %p192
      $region38: #{cnn_feature_forward.1} parent=11 // pred_check_branch
        %358 = sbr.rel (%p356) target = $region40
      $region39: #{cnn_feature_forward.1} parent=11 // pred_region
        _
      $region40: #{cnn_feature_forward.1} parent=11 // pred_fallthru
        _
      // Predicated region
      $region41: #{cnn_feature_forward.1} parent=11 // pred_check
        %p359 = pneg %p213
      $region42: #{cnn_feature_forward.1} parent=11 // pred_check_branch
        %361 = sbr.rel (%p359) target = $region44
      $region43: #{cnn_feature_forward.1} parent=11 // pred_region
        _
      $region44: #{cnn_feature_forward.1} parent=11 // pred_fallthru
        _
      // Predicated region
      $region45: #{cnn_feature_forward.1} parent=11 // pred_check
        %p362 = pneg %p234
      $region46: #{cnn_feature_forward.1} parent=11 // pred_check_branch
        %364 = sbr.rel (%p362) target = $region48
      $region47: #{cnn_feature_forward.1} parent=11 // pred_region
        _
      $region48: #{cnn_feature_forward.1} parent=11 // pred_fallthru
        _
      // Predicated region
      $region49: #{cnn_feature_forward.1} parent=11 // pred_check
        %p365 = pneg %p255
      $region50: #{cnn_feature_forward.1} parent=11 // pred_check_branch
        %367 = sbr.rel (%p365) target = $region52
      $region51: #{cnn_feature_forward.1} parent=11 // pred_region
        _
      $region52: #{cnn_feature_forward.1} parent=11 // pred_fallthru
        _
      // Predicated region
      $region53: #{cnn_feature_forward.1} parent=11 // pred_check
        %p368 = pneg %p276
      $region54: #{cnn_feature_forward.1} parent=11 // pred_check_branch
        %370 = sbr.rel (%p368) target = $region56
      $region55: #{cnn_feature_forward.1} parent=11 // pred_region
        _
      $region56: #{cnn_feature_forward.1} parent=11 // pred_fallthru
        _
      // Predicated region
      $region57: #{cnn_feature_forward.1} parent=11 // pred_check
        %p371 = pneg %p297
      $region58: #{cnn_feature_forward.1} parent=11 // pred_check_branch
        %373 = sbr.rel (%p371) target = $region60
      $region59: #{cnn_feature_forward.1} parent=11 // pred_region
        _
      $region60: #{cnn_feature_forward.1} parent=11 // pred_fallthru
        _
    $region12: #{cnn_feature_forward.1} parent=5 // pred_fallthru
      _
    %p374 = scmp.lt.s32.totalorder %s19, 2
    // Predicated region
    $region61: #{cnn_feature_forward.1} parent=5 // pred_check
      %p375 = pneg %p374
    $region62: #{cnn_feature_forward.1} parent=5 // pred_check_branch
      %377 = sbr.rel (%p375) target = $region64
    $region63: #{cnn_feature_forward.1} parent=5 // pred_region
      // Predicated region
      $region65: #{cnn_feature_forward.1} parent=63 // pred_check
        %p378 = pneg %p39
      $region66: #{cnn_feature_forward.1} parent=63 // pred_check_branch
        %380 = sbr.rel (%p378) target = $region68
      $region67: #{cnn_feature_forward.1} parent=63 // pred_region
        %p381 = scmp.lt.s32.totalorder %s19, 1
        %s382 = scalar_select %p381, %s19, 1
        %s383 = smul.addr %s382, 2
        %s384 = smul.addr %s383, 4
        %s385 = scalar_lea.vmem %s0, %s384
      $region68: #{cnn_feature_forward.1} parent=63 // pred_fallthru
        _
    $region64: #{cnn_feature_forward.1} parent=5 // pred_fallthru
      _
    %p386 = scmp.le.s32.totalorder 1, %s19
    %p387 = scmp.lt.s32.totalorder %s19, 3
    %p388 = pnand %p386, %p387
    %p389 = pneg %p388
    // Predicated region
    $region69: #{cnn_feature_forward.1} parent=5 // pred_check
      _
    $region70: #{cnn_feature_forward.1} parent=5 // pred_check_branch
      %391 = sbr.rel (%p388) target = $region72
    $region71: #{cnn_feature_forward.1} parent=5 // pred_region
      %s392 = ssub.s32 %s19, 1
      %p393 = scmp.lt.s32.totalorder %s24, 1
      %s394 = scalar_select %p393, %s24, 1
      %s395 = smul.addr %s394, 2
      %s396 = smul.addr %s395, 4
      %s397 = scalar_lea.vmem %s0, %s396
      %p398 = pneg %p45
      %p399 = pneg %p42
      %p400 = pneg %p66
      %p401 = pneg %p63
      %p402 = pneg %p87
      %p403 = pneg %p84
      %p404 = pneg %p108
      %p405 = pneg %p105
      %p406 = pneg %p129
      %p407 = pneg %p126
      %p408 = pneg %p150
      %p409 = pneg %p147
      %p410 = pneg %p171
      %p411 = pneg %p168
      %p412 = pneg %p192
      %p413 = pneg %p189
      %p414 = pneg %p213
      %p415 = pneg %p210
      %p416 = pneg %p234
      %p417 = pneg %p231
      %p418 = pneg %p255
      %p419 = pneg %p252
      %p420 = pneg %p276
      %p421 = pneg %p273
      %p422 = pneg %p297
      %p423 = pneg %p294
      %p424 = pneg %p323
      %p425 = pneg %p320
      %p426 = scmp.lt.s32.totalorder %s24, 1
      %s427 = scalar_select %p426, %s24, 1
      %s428 = smul.addr %s427, 2
      %s429 = scalar_lea.vmem %s13, %s428
      %p430 = scmp.lt.s32.totalorder %s24, 1
      %s431 = scalar_select %p430, %s24, 1
      %s432 = smul.addr %s431, 2
      %s433 = smul.addr %s432, 4
      %s434 = scalar_lea.vmem %s0, %s433
      %p435 = scmp.lt.s32.totalorder %s24, 1
      %s436 = scalar_select %p435, %s24, 1
      %s437 = smul.addr %s436, 2
      %s438 = scalar_lea.vmem %s13, %s437
      %vm440 = vcmask 122880
      %vm441 = vsmask.f32 256
      %vm442 = vmand %vm440, %vm441
      %v443 = vld [vmem:[#allocation2] sm:$0x1]
      %v444 = vsel %vm442, 0, %v443
      %445 = vst [vmem:[#allocation2] sm:$0x1] %v444
      %vm446 = vsmask.f32 7938
      %vm447 = vmand %vm440, %vm446
      %v448 = vld [vmem:[#allocation2 + $0x8] sm:$0x1]
      %v449 = vsel %vm447, 0, %v448
      %450 = vst [vmem:[#allocation2 + $0x8] sm:$0x1] %v449
      %v451 = vld [vmem:[%s434] sm:$0xf]
      %v452 = vld [vmem:[%s434 + $0x4] sm:$0xf]
      %vm453 = vsmask.f32 4368
      %vm454 = vmor %vm441, %vm453
      %v456 = vshrl.u32 %v451, 16
      %v458 = vrot.slane %v456, 7
      %v459 = vshll.u32 %v451, 16
      %v461 = vor.u32 %v458, %v459
      %v462 = vrot.slane %v458, 4
      %v464 = vshrl.u32 %v452, 16
      %v466 = vrot.slane %v464, 7
      %v467 = vshll.u32 %v452, 16
      %v469 = vor.u32 %v466, %v467
      %v470 = vsel %vm454, %v462, %v469
      %v471 = vrot.slane %v466, 4
      %vm475 = vcmask 125952
      %vm476 = vmand %vm475, %vm446
      %v477 = vld [vmem:[#allocation2] sm:$0xf]
      %v478 = vsel %vm476, %v461, %v477
      %479 = vst [vmem:[#allocation2] sm:$0xf] %v478
      %vm480 = vcmask 125952
      %481 = vst.msk [vmem:[#allocation2 + $0x4] sm:$0xf] %vm480, %v470
      %v482 = vld [vmem:[#allocation2 + $0x8] sm:$0x1]
      %v483 = vsel %vm442, %v471, %v482
      %484 = vst [vmem:[#allocation2 + $0x8] sm:$0x1] %v483
      %v485 = vld [vmem:[#allocation2] sm:$0xf]
      %v486 = vld [vmem:[#allocation2 + $0x4] sm:$0xf]
      %v487 = vld [vmem:[%s1] sm:$0xf]
      %v488 = vld [vmem:[%s1 + $0x4] sm:$0xf]
      %v489 = vld [vmem:[#allocation2 + $0x8] sm:$0x1]
      %s490 = scalar_lea.vmem %s1, 8
      %v491 = vld [vmem:[%s490] sm:$0xf]
      %v492 = vld [vmem:[%s490 + $0x4] sm:$0xf]
      %v496 = vunpack.c.l.b16 %v485
      %v497 = vunpack.c.l.b16 %v486
      %v498 = vunpack.c.l.b16 %v489
      %v499 = vpack.c.b16 %v497, %v496
      %v500 = vpack.c.b16 %v498, %v498
      %vm501 = vsmask.f32 7424
      %v503 = vshrl.u32 %v499, 16
      %v505 = vshll.u32 %v499, 16
      %v507 = vrot.slane %v505, 1
      %v508 = vor.u32 %v503, %v507
      %v510 = vshll.u32 %v500, 16
      %v512 = vrot.slane %v510, 1
      %v513 = vsel %vm501, %v508, %v512
      %v516 = vunpack.c.l.b16 %v491
      %v517 = vunpack.c.l.b16 %v492
      %v518 = vpack.c.b16 %v517, %v516
      %vm520 = vcmask 130048
      %v522 = vsel %vm520, %v513, 0
      %524 = vmatprep.subr.bf16.mxu0 0
      %525 = vmatpush1.bf16.msra.mxu0 %v518
      %526 = vmatprep.subr.bf16.mxu0 0
      %527 = vmatpush1.bf16.msra.mxu0 0
      %528 = vmatprep.subr.bf16.mxu0 0
      %529 = vmatpush1.bf16.msra.mxu0 0
      %530 = vmatprep.subr.bf16.mxu0 0
      %531 = vmatpush1.bf16.msra.mxu0 0
      %532 = vmatprep.subr.bf16.mxu0 0
      %533 = vmatpush1.bf16.msra.mxu0 0
      %534 = vmatprep.subr.bf16.mxu0 0
      %535 = vmatpush1.bf16.msra.mxu0 0
      %536 = vmatprep.subr.bf16.mxu0 0
      %537 = vmatpush1.bf16.msra.mxu0 0
      %538 = vmatprep.subr.bf16.mxu0 0
      %539 = vmatpush1.bf16.msra.mxu0 0
      %540 = vmatprep.subr.bf16.mxu0 0
      %541 = vmatpush1.bf16.msra.mxu0 0
      %542 = vmatprep.subr.bf16.mxu0 0
      %543 = vmatpush1.bf16.msra.mxu0 0
      %544 = vmatprep.subr.bf16.mxu0 0
      %545 = vmatpush1.bf16.msra.mxu0 0
      %546 = vmatprep.subr.bf16.mxu0 0
      %547 = vmatpush1.bf16.msra.mxu0 0
      %548 = vmatprep.subr.bf16.mxu0 0
      %549 = vmatpush1.bf16.msra.mxu0 0
      %550 = vmatprep.subr.bf16.mxu0 0
      %551 = vmatpush1.bf16.msra.mxu0 0
      %552 = vmatprep.subr.bf16.mxu0 0
      %553 = vmatpush1.bf16.msra.mxu0 0
      %554 = vmatprep.subr.bf16.mxu0 0
      %555 = vmatpush1.bf16.msra.mxu0 0
      %556 = vmatprep.mubr.bf16.mxu0 0
      %557 = vmatmul.mubr.bf16.gmra.mrb[0].mxu0 %v522
      %v558 = vpop.f32.mrb[0].mxu0
      %v559 = vadd.f32 0.0, %v558
      %v560 = vpop.f32.mrb[0].mxu0
      %v561 = vpop.f32.mrb[0].mxu0
      %v562 = vadd.f32 0.0, %v561
      %v563 = vpop.f32.mrb[0].mxu0
      %564 = vdwg.mxu0
      %v567 = vunpack.c.l.b16 %v487
      %v568 = vunpack.c.l.b16 %v488
      %v569 = vpack.c.b16 %v568, %v567
      %v571 = vsel %vm520, %v499, 0
      %573 = vmatprep.subr.bf16.mxu0 0
      %574 = vmatpush1.bf16.msra.mxu0 %v569
      %575 = vmatprep.subr.bf16.mxu0 0
      %576 = vmatpush1.bf16.msra.mxu0 0
      %577 = vmatprep.subr.bf16.mxu0 0
      %578 = vmatpush1.bf16.msra.mxu0 0
      %579 = vmatprep.subr.bf16.mxu0 0
      %580 = vmatpush1.bf16.msra.mxu0 0
      %581 = vmatprep.subr.bf16.mxu0 0
      %582 = vmatpush1.bf16.msra.mxu0 0
      %583 = vmatprep.subr.bf16.mxu0 0
      %584 = vmatpush1.bf16.msra.mxu0 0
      %585 = vmatprep.subr.bf16.mxu0 0
      %586 = vmatpush1.bf16.msra.mxu0 0
      %587 = vmatprep.subr.bf16.mxu0 0
      %588 = vmatpush1.bf16.msra.mxu0 0
      %589 = vmatprep.subr.bf16.mxu0 0
      %590 = vmatpush1.bf16.msra.mxu0 0
      %591 = vmatprep.subr.bf16.mxu0 0
      %592 = vmatpush1.bf16.msra.mxu0 0
      %593 = vmatprep.subr.bf16.mxu0 0
      %594 = vmatpush1.bf16.msra.mxu0 0
      %595 = vmatprep.subr.bf16.mxu0 0
      %596 = vmatpush1.bf16.msra.mxu0 0
      %597 = vmatprep.subr.bf16.mxu0 0
      %598 = vmatpush1.bf16.msra.mxu0 0
      %599 = vmatprep.subr.bf16.mxu0 0
      %600 = vmatpush1.bf16.msra.mxu0 0
      %601 = vmatprep.subr.bf16.mxu0 0
      %602 = vmatpush1.bf16.msra.mxu0 0
      %603 = vmatprep.subr.bf16.mxu0 0
      %604 = vmatpush1.bf16.msra.mxu0 0
      %605 = vmatprep.mubr.bf16.mxu0 0
      %606 = vmatmul.mubr.bf16.gmra.mrb[0].mxu0 %v571
      %v607 = vpop.f32.mrb[0].mxu0
      %v608 = vadd.f32 %v559, %v607
      %v609 = vpop.f32.mrb[0].mxu0
      %v610 = vpop.f32.mrb[0].mxu0
      %v611 = vadd.f32 %v562, %v610
      %v612 = vpop.f32.mrb[0].mxu0
      %613 = vdwg.mxu0
      %v614 = vld [vmem:[#allocation2] sm:$0xe]
      %s615 = scalar_lea.vmem %s1, 16
      %v616 = vld [vmem:[%s615] sm:$0xf]
      %v617 = vld [vmem:[%s615 + $0x4] sm:$0xf]
      %v619 = vunpack.c.l.b16 %v614
      %v620 = vpack.c.b16 %v497, %v619
      %vm621 = vcmask 1046528
      %v622 = vrot.slane %v620, 1
      %v623 = vrot.slane %v500, 1
      %v624 = vsel %vm621, %v622, %v623
      %v627 = vunpack.c.l.b16 %v616
      %v628 = vunpack.c.l.b16 %v617
      %v629 = vpack.c.b16 %v628, %v627
      %v632 = vsel %vm520, %v624, 0
      %634 = vmatprep.subr.bf16.mxu0 0
      %635 = vmatpush1.bf16.msra.mxu0 %v629
      %636 = vmatprep.subr.bf16.mxu0 0
      %637 = vmatpush1.bf16.msra.mxu0 0
      %638 = vmatprep.subr.bf16.mxu0 0
      %639 = vmatpush1.bf16.msra.mxu0 0
      %640 = vmatprep.subr.bf16.mxu0 0
      %641 = vmatpush1.bf16.msra.mxu0 0
      %642 = vmatprep.subr.bf16.mxu0 0
      %643 = vmatpush1.bf16.msra.mxu0 0
      %644 = vmatprep.subr.bf16.mxu0 0
      %645 = vmatpush1.bf16.msra.mxu0 0
      %646 = vmatprep.subr.bf16.mxu0 0
      %647 = vmatpush1.bf16.msra.mxu0 0
      %648 = vmatprep.subr.bf16.mxu0 0
      %649 = vmatpush1.bf16.msra.mxu0 0
      %650 = vmatprep.subr.bf16.mxu0 0
      %651 = vmatpush1.bf16.msra.mxu0 0
      %652 = vmatprep.subr.bf16.mxu0 0
      %653 = vmatpush1.bf16.msra.mxu0 0
      %654 = vmatprep.subr.bf16.mxu0 0
      %655 = vmatpush1.bf16.msra.mxu0 0
      %656 = vmatprep.subr.bf16.mxu0 0
      %657 = vmatpush1.bf16.msra.mxu0 0
      %658 = vmatprep.subr.bf16.mxu0 0
      %659 = vmatpush1.bf16.msra.mxu0 0
      %660 = vmatprep.subr.bf16.mxu0 0
      %661 = vmatpush1.bf16.msra.mxu0 0
      %662 = vmatprep.subr.bf16.mxu0 0
      %663 = vmatpush1.bf16.msra.mxu0 0
      %664 = vmatprep.subr.bf16.mxu0 0
      %665 = vmatpush1.bf16.msra.mxu0 0
      %666 = vmatprep.mubr.bf16.mxu0 0
      %667 = vmatmul.mubr.bf16.gmra.mrb[0].mxu0 %v632
      %v668 = vpop.f32.mrb[0].mxu0
      %v669 = vadd.f32 0.0, %v668
      %v670 = vpop.f32.mrb[0].mxu0
      %v671 = vpop.f32.mrb[0].mxu0
      %v672 = vadd.f32 0.0, %v671
      %v673 = vpop.f32.mrb[0].mxu0
      %674 = vdwg.mxu0
      %v675 = vadd.f32 %v608, %v669
      %v676 = vadd.f32 %v611, %v672
      %v677 = vld [vmem:[%s2] sm:$0x1]
      %v679 = vlaneseq
      %v680 = vshrl.u32 %v679, 7
      %v681 = vsub.s32 0, %v680
      %v682 = vrot.slane %v677, %v681
      %v684 = vadd.f32 %v675, %v682
      %v685 = vadd.f32 %v676, %v682
      %v686 = vmax.f32 %v684, 0.0
      %v687 = vmax.f32 %v685, 0.0
      %v688 = vpack.c.bf16 %v687, %v686
      %v690 = vunpack.c.l.b16 %v688
      %v691 = vunpack.c.h.b16 %v688
      %v692 = vpack.c.b16 %v690, %v690
      %v693 = vpack.c.b16 %v691, %v691
      %v695 = vshrl.u32 %v692, 16
      %v697 = vrot.slane %v695, 7
      %v698 = vshll.u32 %v692, 16
      %v700 = vor.u32 %v697, %v698
      %v701 = vrot.slane %v697, 4
      %v703 = vshrl.u32 %v693, 16
      %v705 = vrot.slane %v703, 7
      %v706 = vshll.u32 %v693, 16
      %v708 = vor.u32 %v705, %v706
      %v709 = vsel %vm454, %v701, %v708
      %v710 = vrot.slane %v705, 4
      %vm714 = vcmask 519168
      %vm715 = vmand %vm714, %vm446
      %v716 = vld [vmem:[#allocation3] sm:$0xf]
      %v717 = vsel %vm715, %v700, %v716
      %718 = vst [vmem:[#allocation3] sm:$0xf] %v717
      %vm719 = vcmask 519168
      %720 = vst.msk [vmem:[#allocation3 + $0x4] sm:$0xf] %vm719, %v709
      %vm721 = vcmask 516096
      %vm722 = vmand %vm721, %vm441
      %v723 = vld [vmem:[#allocation3 + $0x8] sm:$0x1]
      %v724 = vsel %vm722, %v710, %v723
      %725 = vst [vmem:[#allocation3 + $0x8] sm:$0x1] %v724
      %v726 = vld [vmem:[#allocation3] sm:$0x1]
      %v727 = vsel %vm722, 0, %v726
      %728 = vst [vmem:[#allocation3] sm:$0x1] %v727
      %vm729 = vmand %vm721, %vm446
      %v730 = vld [vmem:[#allocation3 + $0x8] sm:$0x1]
      %v731 = vsel %vm729, 0, %v730
      %732 = vst [vmem:[#allocation3 + $0x8] sm:$0x1] %v731
      %v733 = vld [vmem:[#allocation2] sm:$0xf]
      %v734 = vld [vmem:[#allocation2 + $0x4] sm:$0xf]
      %v735 = vld [vmem:[#allocation2 + $0x8] sm:$0x1]
      %v736 = vld [vmem:[%s5] sm:$0xf]
      %v737 = vld [vmem:[%s5 + $0x4] sm:$0xf]
      %v738 = vld [vmem:[%s6] sm:$0x1]
      %v740 = vlaneseq
      %v741 = vshrl.u32 %v740, 7
      %v742 = vsub.s32 0, %v741
      %v743 = vrot.slane %v738, %v742
      %v748 = vunpack.c.l.b16 %v733
      %v749 = vunpack.c.l.b16 %v734
      %v750 = vunpack.c.l.b16 %v735
      %v751 = vpack.c.b16 %v749, %v748
      %v752 = vpack.c.b16 %v750, %v750
      %v754 = vshrl.u32 %v751, 16
      %v756 = vshll.u32 %v751, 16
      %v758 = vrot.slane %v756, 1
      %v759 = vor.u32 %v754, %v758
      %v761 = vshll.u32 %v752, 16
      %v763 = vrot.slane %v761, 1
      %v764 = vsel %vm501, %v759, %v763
      %v767 = vunpack.c.l.b16 %v736
      %v768 = vunpack.c.l.b16 %v737
      %v769 = vpack.c.b16 %v768, %v767
      %v772 = vsel %vm520, %v764, 0
      %774 = vmatprep.subr.bf16.mxu0 0
      %775 = vmatpush1.bf16.msra.mxu0 %v769
      %776 = vmatprep.subr.bf16.mxu0 0
      %777 = vmatpush1.bf16.msra.mxu0 0
      %778 = vmatprep.subr.bf16.mxu0 0
      %779 = vmatpush1.bf16.msra.mxu0 0
      %780 = vmatprep.subr.bf16.mxu0 0
      %781 = vmatpush1.bf16.msra.mxu0 0
      %782 = vmatprep.subr.bf16.mxu0 0
      %783 = vmatpush1.bf16.msra.mxu0 0
      %784 = vmatprep.subr.bf16.mxu0 0
      %785 = vmatpush1.bf16.msra.mxu0 0
      %786 = vmatprep.subr.bf16.mxu0 0
      %787 = vmatpush1.bf16.msra.mxu0 0
      %788 = vmatprep.subr.bf16.mxu0 0
      %789 = vmatpush1.bf16.msra.mxu0 0
      %790 = vmatprep.subr.bf16.mxu0 0
      %791 = vmatpush1.bf16.msra.mxu0 0
      %792 = vmatprep.subr.bf16.mxu0 0
      %793 = vmatpush1.bf16.msra.mxu0 0
      %794 = vmatprep.subr.bf16.mxu0 0
      %795 = vmatpush1.bf16.msra.mxu0 0
      %796 = vmatprep.subr.bf16.mxu0 0
      %797 = vmatpush1.bf16.msra.mxu0 0
      %798 = vmatprep.subr.bf16.mxu0 0
      %799 = vmatpush1.bf16.msra.mxu0 0
      %800 = vmatprep.subr.bf16.mxu0 0
      %801 = vmatpush1.bf16.msra.mxu0 0
      %802 = vmatprep.subr.bf16.mxu0 0
      %803 = vmatpush1.bf16.msra.mxu0 0
      %804 = vmatprep.subr.bf16.mxu0 0
      %805 = vmatpush1.bf16.msra.mxu0 0
      %806 = vmatprep.mubr.bf16.mxu0 0
      %807 = vmatmul.mubr.bf16.gmra.mrb[0].mxu0 %v772
      %v808 = vpop.f32.mrb[0].mxu0
      %v809 = vadd.f32 %v743, %v808
      %v810 = vpop.f32.mrb[0].mxu0
      %v811 = vpop.f32.mrb[0].mxu0
      %v812 = vadd.f32 %v743, %v811
      %v813 = vpop.f32.mrb[0].mxu0
      %814 = vdwg.mxu0
      %v815 = vld [vmem:[%s4] sm:$0x1]
      %v817 = vlaneseq
      %v818 = vshrl.u32 %v817, 7
      %v819 = vsub.s32 0, %v818
      %v820 = vrot.slane %v815, %v819
      %v822 = vadd.f32 %v809, %v820
      %v823 = vadd.f32 %v812, %v820
      %v824 = vld [vmem:[#allocation3] sm:$0xf]
      %v825 = vld [vmem:[#allocation3 + $0x4] sm:$0xf]
      %v826 = vld [vmem:[%s3] sm:$0xf]
      %v827 = vld [vmem:[%s3 + $0x4] sm:$0xf]
      %v828 = vld [vmem:[%s3 + $0x8] sm:$0xf]
      %v829 = vld [vmem:[%s3 + $0xc] sm:$0xf]
      %v830 = vld [vmem:[%s3 + $0x10] sm:$0xf]
      %v831 = vld [vmem:[%s3 + $0x14] sm:$0xf]
      %v832 = vld [vmem:[%s3 + $0x18] sm:$0xf]
      %v833 = vld [vmem:[%s3 + $0x1c] sm:$0xf]
      %v836 = vunpack.c.l.b16 %v824
      %v837 = vunpack.c.l.b16 %v825
      %v838 = vpack.c.b16 %v837, %v836
      %v847 = vunpack.c.l.b16 %v826
      %v848 = vunpack.c.l.b16 %v827
      %v849 = vunpack.c.l.b16 %v828
      %v850 = vunpack.c.l.b16 %v829
      %v851 = vunpack.c.l.b16 %v830
      %v852 = vunpack.c.l.b16 %v831
      %v853 = vunpack.c.l.b16 %v832
      %v854 = vunpack.c.l.b16 %v833
      %v855 = vpack.c.b16 %v848, %v847
      %v856 = vpack.c.b16 %v850, %v849
      %v857 = vpack.c.b16 %v852, %v851
      %v858 = vpack.c.b16 %v854, %v853
      %vm863 = vcmask 523264
      %v865 = vsel %vm863, %v838, 0
      %867 = vmatprep.subr.bf16.mxu0 0
      %868 = vmatpush1.bf16.msra.mxu0 %v855
      %869 = vmatprep.subr.bf16.mxu0 0
      %870 = vmatpush1.bf16.msra.mxu0 %v856
      %871 = vmatprep.subr.bf16.mxu0 0
      %872 = vmatpush1.bf16.msra.mxu0 %v857
      %873 = vmatprep.subr.bf16.mxu0 0
      %874 = vmatpush1.bf16.msra.mxu0 %v858
      %875 = vmatprep.subr.bf16.mxu0 0
      %876 = vmatpush1.bf16.msra.mxu0 0
      %877 = vmatprep.subr.bf16.mxu0 0
      %878 = vmatpush1.bf16.msra.mxu0 0
      %879 = vmatprep.subr.bf16.mxu0 0
      %880 = vmatpush1.bf16.msra.mxu0 0
      %881 = vmatprep.subr.bf16.mxu0 0
      %882 = vmatpush1.bf16.msra.mxu0 0
      %883 = vmatprep.subr.bf16.mxu0 0
      %884 = vmatpush1.bf16.msra.mxu0 0
      %885 = vmatprep.subr.bf16.mxu0 0
      %886 = vmatpush1.bf16.msra.mxu0 0
      %887 = vmatprep.subr.bf16.mxu0 0
      %888 = vmatpush1.bf16.msra.mxu0 0
      %889 = vmatprep.subr.bf16.mxu0 0
      %890 = vmatpush1.bf16.msra.mxu0 0
      %891 = vmatprep.subr.bf16.mxu0 0
      %892 = vmatpush1.bf16.msra.mxu0 0
      %893 = vmatprep.subr.bf16.mxu0 0
      %894 = vmatpush1.bf16.msra.mxu0 0
      %895 = vmatprep.subr.bf16.mxu0 0
      %896 = vmatpush1.bf16.msra.mxu0 0
      %897 = vmatprep.subr.bf16.mxu0 0
      %898 = vmatpush1.bf16.msra.mxu0 0
      %899 = vmatprep.mubr.bf16.mxu0 0
      %900 = vmatmul.mubr.bf16.gmra.mrb[0].mxu0 %v865
      %v901 = vpop.f32.mrb[0].mxu0
      %v902 = vadd.f32 0.0, %v901
      %v903 = vpop.f32.mrb[0].mxu0
      %v904 = vpop.f32.mrb[0].mxu0
      %v905 = vadd.f32 0.0, %v904
      %v906 = vpop.f32.mrb[0].mxu0
      %907 = vdwg.mxu0
      %v908 = vadd.f32 %v822, %v902
      %v909 = vadd.f32 %v823, %v905
      %v910 = vld [vmem:[#allocation3] sm:$0xf]
      %v911 = vld [vmem:[#allocation3 + $0x4] sm:$0xf]
      %v912 = vld [vmem:[#allocation3 + $0x8] sm:$0x1]
      %s913 = scalar_lea.vmem %s3, 32
      %v914 = vld [vmem:[%s913] sm:$0xf]
      %v915 = vld [vmem:[%s913 + $0x4] sm:$0xf]
      %v916 = vld [vmem:[%s913 + $0x8] sm:$0xf]
      %v917 = vld [vmem:[%s913 + $0xc] sm:$0xf]
      %v918 = vld [vmem:[%s913 + $0x10] sm:$0xf]
      %v919 = vld [vmem:[%s913 + $0x14] sm:$0xf]
      %v920 = vld [vmem:[%s913 + $0x18] sm:$0xf]
      %v921 = vld [vmem:[%s913 + $0x1c] sm:$0xf]
      %v925 = vunpack.c.l.b16 %v910
      %v926 = vunpack.c.l.b16 %v911
      %v927 = vunpack.c.l.b16 %v912
      %v928 = vpack.c.b16 %v926, %v925
      %v929 = vpack.c.b16 %v927, %v927
      %v931 = vshrl.u32 %v928, 16
      %v933 = vshll.u32 %v928, 16
      %v935 = vrot.slane %v933, 1
      %v936 = vor.u32 %v931, %v935
      %v938 = vshll.u32 %v929, 16
      %v940 = vrot.slane %v938, 1
      %v941 = vsel %vm501, %v936, %v940
      %v950 = vunpack.c.l.b16 %v914
      %v951 = vunpack.c.l.b16 %v915
      %v952 = vunpack.c.l.b16 %v916
      %v953 = vunpack.c.l.b16 %v917
      %v954 = vunpack.c.l.b16 %v918
      %v955 = vunpack.c.l.b16 %v919
      %v956 = vunpack.c.l.b16 %v920
      %v957 = vunpack.c.l.b16 %v921
      %v958 = vpack.c.b16 %v951, %v950
      %v959 = vpack.c.b16 %v953, %v952
      %v960 = vpack.c.b16 %v955, %v954
      %v961 = vpack.c.b16 %v957, %v956
      %v967 = vsel %vm863, %v941, 0
      %969 = vmatprep.subr.bf16.mxu0 0
      %970 = vmatpush1.bf16.msra.mxu0 %v958
      %971 = vmatprep.subr.bf16.mxu0 0
      %972 = vmatpush1.bf16.msra.mxu0 %v959
      %973 = vmatprep.subr.bf16.mxu0 0
      %974 = vmatpush1.bf16.msra.mxu0 %v960
      %975 = vmatprep.subr.bf16.mxu0 0
      %976 = vmatpush1.bf16.msra.mxu0 %v961
      %977 = vmatprep.subr.bf16.mxu0 0
      %978 = vmatpush1.bf16.msra.mxu0 0
      %979 = vmatprep.subr.bf16.mxu0 0
      %980 = vmatpush1.bf16.msra.mxu0 0
      %981 = vmatprep.subr.bf16.mxu0 0
      %982 = vmatpush1.bf16.msra.mxu0 0
      %983 = vmatprep.subr.bf16.mxu0 0
      %984 = vmatpush1.bf16.msra.mxu0 0
      %985 = vmatprep.subr.bf16.mxu0 0
      %986 = vmatpush1.bf16.msra.mxu0 0
      %987 = vmatprep.subr.bf16.mxu0 0
      %988 = vmatpush1.bf16.msra.mxu0 0
      %989 = vmatprep.subr.bf16.mxu0 0
      %990 = vmatpush1.bf16.msra.mxu0 0
      %991 = vmatprep.subr.bf16.mxu0 0
      %992 = vmatpush1.bf16.msra.mxu0 0
      %993 = vmatprep.subr.bf16.mxu0 0
      %994 = vmatpush1.bf16.msra.mxu0 0
      %995 = vmatprep.subr.bf16.mxu0 0
      %996 = vmatpush1.bf16.msra.mxu0 0
      %997 = vmatprep.subr.bf16.mxu0 0
      %998 = vmatpush1.bf16.msra.mxu0 0
      %999 = vmatprep.subr.bf16.mxu0 0
      %1000 = vmatpush1.bf16.msra.mxu0 0
      %1001 = vmatprep.mubr.bf16.mxu0 0
      %1002 = vmatmul.mubr.bf16.gmra.mrb[0].mxu0 %v967
      %v1003 = vpop.f32.mrb[0].mxu0
      %v1004 = vadd.f32 0.0, %v1003
      %v1005 = vpop.f32.mrb[0].mxu0
      %v1006 = vpop.f32.mrb[0].mxu0
      %v1007 = vadd.f32 0.0, %v1006
      %v1008 = vpop.f32.mrb[0].mxu0
      %1009 = vdwg.mxu0
      %v1010 = vadd.f32 %v908, %v1004
      %v1011 = vadd.f32 %v909, %v1007
      %v1012 = vld [vmem:[#allocation3] sm:$0xe]
      %s1013 = scalar_lea.vmem %s3, 64
      %v1014 = vld [vmem:[%s1013] sm:$0xf]
      %v1015 = vld [vmem:[%s1013 + $0x4] sm:$0xf]
      %v1016 = vld [vmem:[%s1013 + $0x8] sm:$0xf]
      %v1017 = vld [vmem:[%s1013 + $0xc] sm:$0xf]
      %v1018 = vld [vmem:[%s1013 + $0x10] sm:$0xf]
      %v1019 = vld [vmem:[%s1013 + $0x14] sm:$0xf]
      %v1020 = vld [vmem:[%s1013 + $0x18] sm:$0xf]
      %v1021 = vld [vmem:[%s1013 + $0x1c] sm:$0xf]
      %v1023 = vunpack.c.l.b16 %v1012
      %v1024 = vpack.c.b16 %v926, %v1023
      %v1025 = vrot.slane %v1024, 1
      %v1026 = vrot.slane %v929, 1
      %v1027 = vsel %vm621, %v1025, %v1026
      %v1036 = vunpack.c.l.b16 %v1014
      %v1037 = vunpack.c.l.b16 %v1015
      %v1038 = vunpack.c.l.b16 %v1016
      %v1039 = vunpack.c.l.b16 %v1017
      %v1040 = vunpack.c.l.b16 %v1018
      %v1041 = vunpack.c.l.b16 %v1019
      %v1042 = vunpack.c.l.b16 %v1020
      %v1043 = vunpack.c.l.b16 %v1021
      %v1044 = vpack.c.b16 %v1037, %v1036
      %v1045 = vpack.c.b16 %v1039, %v1038
      %v1046 = vpack.c.b16 %v1041, %v1040
      %v1047 = vpack.c.b16 %v1043, %v1042
      %v1053 = vsel %vm863, %v1027, 0
      %1055 = vmatprep.subr.bf16.mxu0 0
      %1056 = vmatpush1.bf16.msra.mxu0 %v1044
      %1057 = vmatprep.subr.bf16.mxu0 0
      %1058 = vmatpush1.bf16.msra.mxu0 %v1045
      %1059 = vmatprep.subr.bf16.mxu0 0
      %1060 = vmatpush1.bf16.msra.mxu0 %v1046
      %1061 = vmatprep.subr.bf16.mxu0 0
      %1062 = vmatpush1.bf16.msra.mxu0 %v1047
      %1063 = vmatprep.subr.bf16.mxu0 0
      %1064 = vmatpush1.bf16.msra.mxu0 0
      %1065 = vmatprep.subr.bf16.mxu0 0
      %1066 = vmatpush1.bf16.msra.mxu0 0
      %1067 = vmatprep.subr.bf16.mxu0 0
      %1068 = vmatpush1.bf16.msra.mxu0 0
      %1069 = vmatprep.subr.bf16.mxu0 0
      %1070 = vmatpush1.bf16.msra.mxu0 0
      %1071 = vmatprep.subr.bf16.mxu0 0
      %1072 = vmatpush1.bf16.msra.mxu0 0
      %1073 = vmatprep.subr.bf16.mxu0 0
      %1074 = vmatpush1.bf16.msra.mxu0 0
      %1075 = vmatprep.subr.bf16.mxu0 0
      %1076 = vmatpush1.bf16.msra.mxu0 0
      %1077 = vmatprep.subr.bf16.mxu0 0
      %1078 = vmatpush1.bf16.msra.mxu0 0
      %1079 = vmatprep.subr.bf16.mxu0 0
      %1080 = vmatpush1.bf16.msra.mxu0 0
      %1081 = vmatprep.subr.bf16.mxu0 0
      %1082 = vmatpush1.bf16.msra.mxu0 0
      %1083 = vmatprep.subr.bf16.mxu0 0
      %1084 = vmatpush1.bf16.msra.mxu0 0
      %1085 = vmatprep.subr.bf16.mxu0 0
      %1086 = vmatpush1.bf16.msra.mxu0 0
      %1087 = vmatprep.mubr.bf16.mxu0 0
      %1088 = vmatmul.mubr.bf16.gmra.mrb[0].mxu0 %v1053
      %v1089 = vpop.f32.mrb[0].mxu0
      %v1090 = vadd.f32 0.0, %v1089
      %v1091 = vpop.f32.mrb[0].mxu0
      %v1092 = vpop.f32.mrb[0].mxu0
      %v1093 = vadd.f32 0.0, %v1092
      %v1094 = vpop.f32.mrb[0].mxu0
      %1095 = vdwg.mxu0
      %v1096 = vadd.f32 %v1010, %v1090
      %v1097 = vadd.f32 %v1011, %v1093
      %v1098 = vmax.f32 %v1096, 0.0
      %v1099 = vmax.f32 %v1097, 0.0
      %1100 = vst.msk [vmem:[#allocation4] sm:$0xff] %vm863, %v1098
      %1101 = vst.msk [vmem:[#allocation4 + $0x8] sm:$0xff] %vm863, %v1099
      %v1102 = vld [vmem:[#allocation4] ss:$2 sm:$0xff]
      %s1103 = scalar_lea.vmem [#allocation4], 1
      %v1104 = vld [vmem:[%s1103] ss:$2 sm:$0xff]
      %v1105 = vmax.f32 %v1102, %v1104
      %v1106 = vld [vmem:[#allocation5] sm:$0x1]
      %v1107 = vsel %vm722, 0, %v1106
      %1108 = vst [vmem:[#allocation5] sm:$0x1] %v1107
      %v1109 = vld [vmem:[#allocation5 + $0x4] sm:$0x1]
      %v1110 = vsel %vm729, 0, %v1109
      %1111 = vst [vmem:[#allocation5 + $0x4] sm:$0x1] %v1110
      %v1112 = vpack.c.bf16 %v1105, %v1105
      %v1114 = vunpack.c.l.b16 %v1112
      %v1115 = vpack.c.b16 %v1114, %v1114
      %v1117 = vshrl.u32 %v1115, 16
      %v1119 = vrot.slane %v1117, 7
      %v1120 = vshll.u32 %v1115, 16
      %v1122 = vor.u32 %v1119, %v1120
      %v1123 = vrot.slane %v1119, 4
      %v1126 = vld [vmem:[#allocation5] sm:$0xf]
      %v1127 = vsel %vm715, %v1122, %v1126
      %1128 = vst [vmem:[#allocation5] sm:$0xf] %v1127
      %v1129 = vld [vmem:[#allocation5 + $0x4] sm:$0x1]
      %v1130 = vsel %vm722, %v1123, %v1129
      %1131 = vst [vmem:[#allocation5 + $0x4] sm:$0x1] %v1130
      %v1132 = vld [vmem:[#allocation5] sm:$0xf]
      %v1133 = vld [vmem:[%s7] sm:$0xf]
      %v1134 = vld [vmem:[%s7 + $0x4] sm:$0xf]
      %v1135 = vld [vmem:[%s7 + $0x8] sm:$0xf]
      %v1136 = vld [vmem:[%s7 + $0xc] sm:$0xf]
      %v1137 = vld [vmem:[%s7 + $0x10] sm:$0xf]
      %v1138 = vld [vmem:[%s7 + $0x14] sm:$0xf]
      %v1139 = vld [vmem:[%s7 + $0x18] sm:$0xf]
      %v1140 = vld [vmem:[%s7 + $0x1c] sm:$0xf]
      %v1141 = vld [vmem:[#allocation5 + $0x4] sm:$0x1]
      %s1142 = scalar_lea.vmem %s7, 32
      %v1143 = vld [vmem:[%s1142] sm:$0xf]
      %v1144 = vld [vmem:[%s1142 + $0x4] sm:$0xf]
      %v1145 = vld [vmem:[%s1142 + $0x8] sm:$0xf]
      %v1146 = vld [vmem:[%s1142 + $0xc] sm:$0xf]
      %v1147 = vld [vmem:[%s1142 + $0x10] sm:$0xf]
      %v1148 = vld [vmem:[%s1142 + $0x14] sm:$0xf]
      %v1149 = vld [vmem:[%s1142 + $0x18] sm:$0xf]
      %v1150 = vld [vmem:[%s1142 + $0x1c] sm:$0xf]
      %v1153 = vunpack.c.l.b16 %v1132
      %v1154 = vunpack.c.l.b16 %v1141
      %v1155 = vpack.c.b16 %v1154, %v1153
      %v1157 = vshrl.u32 %v1155, 16
      %v1159 = vshll.u32 %v1155, 16
      %v1161 = vrot.slane %v1159, 1
      %v1162 = vor.u32 %v1157, %v1161
      %v1171 = vunpack.c.l.b16 %v1143
      %v1172 = vunpack.c.l.b16 %v1144
      %v1173 = vunpack.c.l.b16 %v1145
      %v1174 = vunpack.c.l.b16 %v1146
      %v1175 = vunpack.c.l.b16 %v1147
      %v1176 = vunpack.c.l.b16 %v1148
      %v1177 = vunpack.c.l.b16 %v1149
      %v1178 = vunpack.c.l.b16 %v1150
      %v1179 = vpack.c.b16 %v1172, %v1171
      %v1180 = vpack.c.b16 %v1174, %v1173
      %v1181 = vpack.c.b16 %v1176, %v1175
      %v1182 = vpack.c.b16 %v1178, %v1177
      %v1188 = vsel %vm863, %v1162, 0
      %1190 = vmatprep.subr.bf16.mxu0 0
      %1191 = vmatpush1.bf16.msra.mxu0 %v1179
      %1192 = vmatprep.subr.bf16.mxu0 0
      %1193 = vmatpush1.bf16.msra.mxu0 %v1180
      %1194 = vmatprep.subr.bf16.mxu0 0
      %1195 = vmatpush1.bf16.msra.mxu0 %v1181
      %1196 = vmatprep.subr.bf16.mxu0 0
      %1197 = vmatpush1.bf16.msra.mxu0 %v1182
      %1198 = vmatprep.subr.bf16.mxu0 0
      %1199 = vmatpush1.bf16.msra.mxu0 0
      %1200 = vmatprep.subr.bf16.mxu0 0
      %1201 = vmatpush1.bf16.msra.mxu0 0
      %1202 = vmatprep.subr.bf16.mxu0 0
      %1203 = vmatpush1.bf16.msra.mxu0 0
      %1204 = vmatprep.subr.bf16.mxu0 0
      %1205 = vmatpush1.bf16.msra.mxu0 0
      %1206 = vmatprep.subr.bf16.mxu0 0
      %1207 = vmatpush1.bf16.msra.mxu0 0
      %1208 = vmatprep.subr.bf16.mxu0 0
      %1209 = vmatpush1.bf16.msra.mxu0 0
      %1210 = vmatprep.subr.bf16.mxu0 0
      %1211 = vmatpush1.bf16.msra.mxu0 0
      %1212 = vmatprep.subr.bf16.mxu0 0
      %1213 = vmatpush1.bf16.msra.mxu0 0
      %1214 = vmatprep.subr.bf16.mxu0 0
      %1215 = vmatpush1.bf16.msra.mxu0 0
      %1216 = vmatprep.subr.bf16.mxu0 0
      %1217 = vmatpush1.bf16.msra.mxu0 0
      %1218 = vmatprep.subr.bf16.mxu0 0
      %1219 = vmatpush1.bf16.msra.mxu0 0
      %1220 = vmatprep.subr.bf16.mxu0 0
      %1221 = vmatpush1.bf16.msra.mxu0 0
      %1222 = vmatprep.mubr.bf16.mxu0 0
      %1223 = vmatmul.mubr.bf16.gmra.mrb[0].mxu0 %v1188
      %v1224 = vpop.f32.mrb[0].mxu0
      %v1225 = vadd.f32 0.0, %v1224
      %v1226 = vpop.f32.mrb[0].mxu0
      %v1227 = vpop.f32.mrb[0].mxu0
      %v1228 = vpop.f32.mrb[0].mxu0
      %1229 = vdwg.mxu0
      %v1238 = vunpack.c.l.b16 %v1133
      %v1239 = vunpack.c.l.b16 %v1134
      %v1240 = vunpack.c.l.b16 %v1135
      %v1241 = vunpack.c.l.b16 %v1136
      %v1242 = vunpack.c.l.b16 %v1137
      %v1243 = vunpack.c.l.b16 %v1138
      %v1244 = vunpack.c.l.b16 %v1139
      %v1245 = vunpack.c.l.b16 %v1140
      %v1246 = vpack.c.b16 %v1239, %v1238
      %v1247 = vpack.c.b16 %v1241, %v1240
      %v1248 = vpack.c.b16 %v1243, %v1242
      %v1249 = vpack.c.b16 %v1245, %v1244
      %v1255 = vsel %vm863, %v1132, 0
      %1257 = vmatprep.subr.bf16.mxu0 0
      %1258 = vmatpush1.bf16.msra.mxu0 %v1246
      %1259 = vmatprep.subr.bf16.mxu0 0
      %1260 = vmatpush1.bf16.msra.mxu0 %v1247
      %1261 = vmatprep.subr.bf16.mxu0 0
      %1262 = vmatpush1.bf16.msra.mxu0 %v1248
      %1263 = vmatprep.subr.bf16.mxu0 0
      %1264 = vmatpush1.bf16.msra.mxu0 %v1249
      %1265 = vmatprep.subr.bf16.mxu0 0
      %1266 = vmatpush1.bf16.msra.mxu0 0
      %1267 = vmatprep.subr.bf16.mxu0 0
      %1268 = vmatpush1.bf16.msra.mxu0 0
      %1269 = vmatprep.subr.bf16.mxu0 0
      %1270 = vmatpush1.bf16.msra.mxu0 0
      %1271 = vmatprep.subr.bf16.mxu0 0
      %1272 = vmatpush1.bf16.msra.mxu0 0
      %1273 = vmatprep.subr.bf16.mxu0 0
      %1274 = vmatpush1.bf16.msra.mxu0 0
      %1275 = vmatprep.subr.bf16.mxu0 0
      %1276 = vmatpush1.bf16.msra.mxu0 0
      %1277 = vmatprep.subr.bf16.mxu0 0
      %1278 = vmatpush1.bf16.msra.mxu0 0
      %1279 = vmatprep.subr.bf16.mxu0 0
      %1280 = vmatpush1.bf16.msra.mxu0 0
      %1281 = vmatprep.subr.bf16.mxu0 0
      %1282 = vmatpush1.bf16.msra.mxu0 0
      %1283 = vmatprep.subr.bf16.mxu0 0
      %1284 = vmatpush1.bf16.msra.mxu0 0
      %1285 = vmatprep.subr.bf16.mxu0 0
      %1286 = vmatpush1.bf16.msra.mxu0 0
      %1287 = vmatprep.subr.bf16.mxu0 0
      %1288 = vmatpush1.bf16.msra.mxu0 0
      %1289 = vmatprep.mubr.bf16.mxu0 0
      %1290 = vmatmul.mubr.bf16.gmra.mrb[0].mxu0 %v1255
      %v1291 = vpop.f32.mrb[0].mxu0
      %v1292 = vadd.f32 %v1225, %v1291
      %v1293 = vpop.f32.mrb[0].mxu0
      %v1294 = vpop.f32.mrb[0].mxu0
      %v1295 = vpop.f32.mrb[0].mxu0
      %1296 = vdwg.mxu0
      %v1297 = vld [vmem:[#allocation5] sm:$0xe]
      %s1298 = scalar_lea.vmem %s7, 64
      %v1299 = vld [vmem:[%s1298] sm:$0xf]
      %v1300 = vld [vmem:[%s1298 + $0x4] sm:$0xf]
      %v1301 = vld [vmem:[%s1298 + $0x8] sm:$0xf]
      %v1302 = vld [vmem:[%s1298 + $0xc] sm:$0xf]
      %v1303 = vld [vmem:[%s1298 + $0x10] sm:$0xf]
      %v1304 = vld [vmem:[%s1298 + $0x14] sm:$0xf]
      %v1305 = vld [vmem:[%s1298 + $0x18] sm:$0xf]
      %v1306 = vld [vmem:[%s1298 + $0x1c] sm:$0xf]
      %v1308 = vunpack.c.l.b16 %v1297
      %v1309 = vpack.c.b16 %v1154, %v1308
      %v1310 = vrot.slane %v1309, 1
      %v1319 = vunpack.c.l.b16 %v1299
      %v1320 = vunpack.c.l.b16 %v1300
      %v1321 = vunpack.c.l.b16 %v1301
      %v1322 = vunpack.c.l.b16 %v1302
      %v1323 = vunpack.c.l.b16 %v1303
      %v1324 = vunpack.c.l.b16 %v1304
      %v1325 = vunpack.c.l.b16 %v1305
      %v1326 = vunpack.c.l.b16 %v1306
      %v1327 = vpack.c.b16 %v1320, %v1319
      %v1328 = vpack.c.b16 %v1322, %v1321
      %v1329 = vpack.c.b16 %v1324, %v1323
      %v1330 = vpack.c.b16 %v1326, %v1325
      %v1336 = vsel %vm863, %v1310, 0
      %1338 = vmatprep.subr.bf16.mxu0 0
      %1339 = vmatpush1.bf16.msra.mxu0 %v1327
      %1340 = vmatprep.subr.bf16.mxu0 0
      %1341 = vmatpush1.bf16.msra.mxu0 %v1328
      %1342 = vmatprep.subr.bf16.mxu0 0
      %1343 = vmatpush1.bf16.msra.mxu0 %v1329
      %1344 = vmatprep.subr.bf16.mxu0 0
      %1345 = vmatpush1.bf16.msra.mxu0 %v1330
      %1346 = vmatprep.subr.bf16.mxu0 0
      %1347 = vmatpush1.bf16.msra.mxu0 0
      %1348 = vmatprep.subr.bf16.mxu0 0
      %1349 = vmatpush1.bf16.msra.mxu0 0
      %1350 = vmatprep.subr.bf16.mxu0 0
      %1351 = vmatpush1.bf16.msra.mxu0 0
      %1352 = vmatprep.subr.bf16.mxu0 0
      %1353 = vmatpush1.bf16.msra.mxu0 0
      %1354 = vmatprep.subr.bf16.mxu0 0
      %1355 = vmatpush1.bf16.msra.mxu0 0
      %1356 = vmatprep.subr.bf16.mxu0 0
      %1357 = vmatpush1.bf16.msra.mxu0 0
      %1358 = vmatprep.subr.bf16.mxu0 0
      %1359 = vmatpush1.bf16.msra.mxu0 0
      %1360 = vmatprep.subr.bf16.mxu0 0
      %1361 = vmatpush1.bf16.msra.mxu0 0
      %1362 = vmatprep.subr.bf16.mxu0 0
      %1363 = vmatpush1.bf16.msra.mxu0 0
      %1364 = vmatprep.subr.bf16.mxu0 0
      %1365 = vmatpush1.bf16.msra.mxu0 0
      %1366 = vmatprep.subr.bf16.mxu0 0
      %1367 = vmatpush1.bf16.msra.mxu0 0
      %1368 = vmatprep.subr.bf16.mxu0 0
      %1369 = vmatpush1.bf16.msra.mxu0 0
      %1370 = vmatprep.mubr.bf16.mxu0 0
      %1371 = vmatmul.mubr.bf16.gmra.mrb[0].mxu0 %v1336
      %v1372 = vpop.f32.mrb[0].mxu0
      %v1373 = vadd.f32 0.0, %v1372
      %v1374 = vpop.f32.mrb[0].mxu0
      %v1375 = vpop.f32.mrb[0].mxu0
      %v1376 = vpop.f32.mrb[0].mxu0
      %1377 = vdwg.mxu0
      %v1378 = vadd.f32 %v1292, %v1373
      %v1379 = vld [vmem:[%s8] sm:$0x1]
      %v1381 = vlaneseq
      %v1382 = vshrl.u32 %v1381, 7
      %v1383 = vsub.s32 0, %v1382
      %v1384 = vrot.slane %v1379, %v1383
      %v1386 = vadd.f32 %v1378, %v1384
      %v1387 = vmax.f32 %v1386, 0.0
      %v1388 = vpack.c.bf16 %v1387, %v1387
      %v1390 = vunpack.c.l.b16 %v1388
      %v1391 = vpack.c.b16 %v1390, %v1390
      %v1393 = vshrl.u32 %v1391, 16
      %v1395 = vrot.slane %v1393, 7
      %v1396 = vshll.u32 %v1391, 16
      %v1398 = vor.u32 %v1395, %v1396
      %v1399 = vrot.slane %v1395, 4
      %vm1402 = vcmask 1043456
      %vm1403 = vmand %vm1402, %vm446
      %v1404 = vld [vmem:[#allocation6] sm:$0xf]
      %v1405 = vsel %vm1403, %v1398, %v1404
      %1406 = vst [vmem:[#allocation6] sm:$0xf] %v1405
      %vm1407 = vcmask 1040384
      %vm1408 = vmand %vm1407, %vm441
      %v1409 = vld [vmem:[#allocation6 + $0x4] sm:$0x1]
      %v1410 = vsel %vm1408, %v1399, %v1409
      %1411 = vst [vmem:[#allocation6 + $0x4] sm:$0x1] %v1410
      %v1412 = vld [vmem:[#allocation6] sm:$0x1]
      %v1413 = vsel %vm1408, 0, %v1412
      %1414 = vst [vmem:[#allocation6] sm:$0x1] %v1413
      %vm1415 = vmand %vm1407, %vm446
      %v1416 = vld [vmem:[#allocation6 + $0x4] sm:$0x1]
      %v1417 = vsel %vm1415, 0, %v1416
      %1418 = vst [vmem:[#allocation6 + $0x4] sm:$0x1] %v1417
      %v1419 = vld [vmem:[#allocation5] sm:$0xf]
      %v1420 = vld [vmem:[#allocation5 + $0x4] sm:$0x1]
      %v1421 = vld [vmem:[%s11] sm:$0xf]
      %v1422 = vld [vmem:[%s11 + $0x4] sm:$0xf]
      %v1423 = vld [vmem:[%s11 + $0x8] sm:$0xf]
      %v1424 = vld [vmem:[%s11 + $0xc] sm:$0xf]
      %v1425 = vld [vmem:[%s11 + $0x10] sm:$0xf]
      %v1426 = vld [vmem:[%s11 + $0x14] sm:$0xf]
      %v1427 = vld [vmem:[%s11 + $0x18] sm:$0xf]
      %v1428 = vld [vmem:[%s11 + $0x1c] sm:$0xf]
      %v1429 = vld [vmem:[%s12] sm:$0x1]
      %v1431 = vlaneseq
      %v1432 = vshrl.u32 %v1431, 7
      %v1433 = vsub.s32 0, %v1432
      %v1434 = vrot.slane %v1429, %v1433
      %v1438 = vunpack.c.l.b16 %v1419
      %v1439 = vunpack.c.l.b16 %v1420
      %v1440 = vpack.c.b16 %v1439, %v1438
      %v1442 = vshrl.u32 %v1440, 16
      %v1444 = vshll.u32 %v1440, 16
      %v1446 = vrot.slane %v1444, 1
      %v1447 = vor.u32 %v1442, %v1446
      %v1456 = vunpack.c.l.b16 %v1421
      %v1457 = vunpack.c.l.b16 %v1422
      %v1458 = vunpack.c.l.b16 %v1423
      %v1459 = vunpack.c.l.b16 %v1424
      %v1460 = vunpack.c.l.b16 %v1425
      %v1461 = vunpack.c.l.b16 %v1426
      %v1462 = vunpack.c.l.b16 %v1427
      %v1463 = vunpack.c.l.b16 %v1428
      %v1464 = vpack.c.b16 %v1457, %v1456
      %v1465 = vpack.c.b16 %v1459, %v1458
      %v1466 = vpack.c.b16 %v1461, %v1460
      %v1467 = vpack.c.b16 %v1463, %v1462
      %v1473 = vsel %vm863, %v1447, 0
      %1475 = vmatprep.subr.bf16.mxu0 0
      %1476 = vmatpush1.bf16.msra.mxu0 %v1464
      %1477 = vmatprep.subr.bf16.mxu0 0
      %1478 = vmatpush1.bf16.msra.mxu0 %v1465
      %1479 = vmatprep.subr.bf16.mxu0 0
      %1480 = vmatpush1.bf16.msra.mxu0 %v1466
      %1481 = vmatprep.subr.bf16.mxu0 0
      %1482 = vmatpush1.bf16.msra.mxu0 %v1467
      %1483 = vmatprep.subr.bf16.mxu0 0
      %1484 = vmatpush1.bf16.msra.mxu0 0
      %1485 = vmatprep.subr.bf16.mxu0 0
      %1486 = vmatpush1.bf16.msra.mxu0 0
      %1487 = vmatprep.subr.bf16.mxu0 0
      %1488 = vmatpush1.bf16.msra.mxu0 0
      %1489 = vmatprep.subr.bf16.mxu0 0
      %1490 = vmatpush1.bf16.msra.mxu0 0
      %1491 = vmatprep.subr.bf16.mxu0 0
      %1492 = vmatpush1.bf16.msra.mxu0 0
      %1493 = vmatprep.subr.bf16.mxu0 0
      %1494 = vmatpush1.bf16.msra.mxu0 0
      %1495 = vmatprep.subr.bf16.mxu0 0
      %1496 = vmatpush1.bf16.msra.mxu0 0
      %1497 = vmatprep.subr.bf16.mxu0 0
      %1498 = vmatpush1.bf16.msra.mxu0 0
      %1499 = vmatprep.subr.bf16.mxu0 0
      %1500 = vmatpush1.bf16.msra.mxu0 0
      %1501 = vmatprep.subr.bf16.mxu0 0
      %1502 = vmatpush1.bf16.msra.mxu0 0
      %1503 = vmatprep.subr.bf16.mxu0 0
      %1504 = vmatpush1.bf16.msra.mxu0 0
      %1505 = vmatprep.subr.bf16.mxu0 0
      %1506 = vmatpush1.bf16.msra.mxu0 0
      %1507 = vmatprep.mubr.bf16.mxu0 0
      %1508 = vmatmul.mubr.bf16.gmra.mrb[0].mxu0 %v1473
      %v1509 = vpop.f32.mrb[0].mxu0
      %v1510 = vadd.f32 %v1434, %v1509
      %v1511 = vpop.f32.mrb[0].mxu0
      %v1512 = vpop.f32.mrb[0].mxu0
      %v1513 = vpop.f32.mrb[0].mxu0
      %1514 = vdwg.mxu0
      %v1515 = vld [vmem:[%s10] sm:$0x1]
      %v1517 = vlaneseq
      %v1518 = vshrl.u32 %v1517, 7
      %v1519 = vsub.s32 0, %v1518
      %v1520 = vrot.slane %v1515, %v1519
      %v1522 = vadd.f32 %v1510, %v1520
      %v1523 = vld [vmem:[#allocation6] sm:$0xf]
      %v1524 = vld [vmem:[%s9] sm:$0xf]
      %v1525 = vld [vmem:[%s9 + $0x4] sm:$0xf]
      %v1526 = vld [vmem:[%s9 + $0x8] sm:$0xf]
      %v1527 = vld [vmem:[%s9 + $0xc] sm:$0xf]
      %v1528 = vld [vmem:[%s9 + $0x10] sm:$0xf]
      %v1529 = vld [vmem:[%s9 + $0x14] sm:$0xf]
      %v1530 = vld [vmem:[%s9 + $0x18] sm:$0xf]
      %v1531 = vld [vmem:[%s9 + $0x1c] sm:$0xf]
      %v1532 = vld [vmem:[%s9 + $0x20] sm:$0xf]
      %v1533 = vld [vmem:[%s9 + $0x24] sm:$0xf]
      %v1534 = vld [vmem:[%s9 + $0x28] sm:$0xf]
      %v1535 = vld [vmem:[%s9 + $0x2c] sm:$0xf]
      %v1536 = vld [vmem:[%s9 + $0x30] sm:$0xf]
      %v1537 = vld [vmem:[%s9 + $0x34] sm:$0xf]
      %v1538 = vld [vmem:[%s9 + $0x38] sm:$0xf]
      %v1539 = vld [vmem:[%s9 + $0x3c] sm:$0xf]
      %v1556 = vunpack.c.l.b16 %v1524
      %v1557 = vunpack.c.l.b16 %v1525
      %v1558 = vunpack.c.l.b16 %v1526
      %v1559 = vunpack.c.l.b16 %v1527
      %v1560 = vunpack.c.l.b16 %v1528
      %v1561 = vunpack.c.l.b16 %v1529
      %v1562 = vunpack.c.l.b16 %v1530
      %v1563 = vunpack.c.l.b16 %v1531
      %v1564 = vunpack.c.l.b16 %v1532
      %v1565 = vunpack.c.l.b16 %v1533
      %v1566 = vunpack.c.l.b16 %v1534
      %v1567 = vunpack.c.l.b16 %v1535
      %v1568 = vunpack.c.l.b16 %v1536
      %v1569 = vunpack.c.l.b16 %v1537
      %v1570 = vunpack.c.l.b16 %v1538
      %v1571 = vunpack.c.l.b16 %v1539
      %v1572 = vpack.c.b16 %v1557, %v1556
      %v1573 = vpack.c.b16 %v1559, %v1558
      %v1574 = vpack.c.b16 %v1561, %v1560
      %v1575 = vpack.c.b16 %v1563, %v1562
      %v1576 = vpack.c.b16 %v1565, %v1564
      %v1577 = vpack.c.b16 %v1567, %v1566
      %v1578 = vpack.c.b16 %v1569, %v1568
      %v1579 = vpack.c.b16 %v1571, %v1570
      %1588 = vmatprep.subr.bf16.mxu0 0
      %1589 = vmatpush1.bf16.msra.mxu0 %v1572
      %1590 = vmatprep.subr.bf16.mxu0 0
      %1591 = vmatpush1.bf16.msra.mxu0 %v1573
      %1592 = vmatprep.subr.bf16.mxu0 0
      %1593 = vmatpush1.bf16.msra.mxu0 %v1574
      %1594 = vmatprep.subr.bf16.mxu0 0
      %1595 = vmatpush1.bf16.msra.mxu0 %v1575
      %1596 = vmatprep.subr.bf16.mxu0 0
      %1597 = vmatpush1.bf16.msra.mxu0 %v1576
      %1598 = vmatprep.subr.bf16.mxu0 0
      %1599 = vmatpush1.bf16.msra.mxu0 %v1577
      %1600 = vmatprep.subr.bf16.mxu0 0
      %1601 = vmatpush1.bf16.msra.mxu0 %v1578
      %1602 = vmatprep.subr.bf16.mxu0 0
      %1603 = vmatpush1.bf16.msra.mxu0 %v1579
      %1604 = vmatprep.subr.bf16.mxu0 0
      %1605 = vmatpush1.bf16.msra.mxu0 0
      %1606 = vmatprep.subr.bf16.mxu0 0
      %1607 = vmatpush1.bf16.msra.mxu0 0
      %1608 = vmatprep.subr.bf16.mxu0 0
      %1609 = vmatpush1.bf16.msra.mxu0 0
      %1610 = vmatprep.subr.bf16.mxu0 0
      %1611 = vmatpush1.bf16.msra.mxu0 0
      %1612 = vmatprep.subr.bf16.mxu0 0
      %1613 = vmatpush1.bf16.msra.mxu0 0
      %1614 = vmatprep.subr.bf16.mxu0 0
      %1615 = vmatpush1.bf16.msra.mxu0 0
      %1616 = vmatprep.subr.bf16.mxu0 0
      %1617 = vmatpush1.bf16.msra.mxu0 0
      %1618 = vmatprep.subr.bf16.mxu0 0
      %1619 = vmatpush1.bf16.msra.mxu0 0
      %1620 = vmatprep.mubr.bf16.mxu0 0
      %1621 = vmatmul.mubr.bf16.gmra.mrb[0].mxu0 %v1523
      %v1622 = vpop.f32.mrb[0].mxu0
      %v1623 = vadd.f32 0.0, %v1622
      %v1624 = vpop.f32.mrb[0].mxu0
      %v1625 = vpop.f32.mrb[0].mxu0
      %v1626 = vpop.f32.mrb[0].mxu0
      %1627 = vdwg.mxu0
      %v1628 = vadd.f32 %v1522, %v1623
      %v1629 = vld [vmem:[#allocation6] sm:$0xf]
      %v1630 = vld [vmem:[#allocation6 + $0x4] sm:$0x1]
      %s1631 = scalar_lea.vmem %s9, 64
      %v1632 = vld [vmem:[%s1631] sm:$0xf]
      %v1633 = vld [vmem:[%s1631 + $0x4] sm:$0xf]
      %v1634 = vld [vmem:[%s1631 + $0x8] sm:$0xf]
      %v1635 = vld [vmem:[%s1631 + $0xc] sm:$0xf]
      %v1636 = vld [vmem:[%s1631 + $0x10] sm:$0xf]
      %v1637 = vld [vmem:[%s1631 + $0x14] sm:$0xf]
      %v1638 = vld [vmem:[%s1631 + $0x18] sm:$0xf]
      %v1639 = vld [vmem:[%s1631 + $0x1c] sm:$0xf]
      %v1640 = vld [vmem:[%s1631 + $0x20] sm:$0xf]
      %v1641 = vld [vmem:[%s1631 + $0x24] sm:$0xf]
      %v1642 = vld [vmem:[%s1631 + $0x28] sm:$0xf]
      %v1643 = vld [vmem:[%s1631 + $0x2c] sm:$0xf]
      %v1644 = vld [vmem:[%s1631 + $0x30] sm:$0xf]
      %v1645 = vld [vmem:[%s1631 + $0x34] sm:$0xf]
      %v1646 = vld [vmem:[%s1631 + $0x38] sm:$0xf]
      %v1647 = vld [vmem:[%s1631 + $0x3c] sm:$0xf]
      %v1650 = vunpack.c.l.b16 %v1629
      %v1651 = vunpack.c.l.b16 %v1630
      %v1652 = vpack.c.b16 %v1651, %v1650
      %v1654 = vshrl.u32 %v1652, 16
      %v1656 = vshll.u32 %v1652, 16
      %v1658 = vrot.slane %v1656, 1
      %v1659 = vor.u32 %v1654, %v1658
      %v1677 = vunpack.c.l.b16 %v1632
      %v1678 = vunpack.c.l.b16 %v1633
      %v1679 = vunpack.c.l.b16 %v1634
      %v1680 = vunpack.c.l.b16 %v1635
      %v1681 = vunpack.c.l.b16 %v1636
      %v1682 = vunpack.c.l.b16 %v1637
      %v1683 = vunpack.c.l.b16 %v1638
      %v1684 = vunpack.c.l.b16 %v1639
      %v1685 = vunpack.c.l.b16 %v1640
      %v1686 = vunpack.c.l.b16 %v1641
      %v1687 = vunpack.c.l.b16 %v1642
      %v1688 = vunpack.c.l.b16 %v1643
      %v1689 = vunpack.c.l.b16 %v1644
      %v1690 = vunpack.c.l.b16 %v1645
      %v1691 = vunpack.c.l.b16 %v1646
      %v1692 = vunpack.c.l.b16 %v1647
      %v1693 = vpack.c.b16 %v1678, %v1677
      %v1694 = vpack.c.b16 %v1680, %v1679
      %v1695 = vpack.c.b16 %v1682, %v1681
      %v1696 = vpack.c.b16 %v1684, %v1683
      %v1697 = vpack.c.b16 %v1686, %v1685
      %v1698 = vpack.c.b16 %v1688, %v1687
      %v1699 = vpack.c.b16 %v1690, %v1689
      %v1700 = vpack.c.b16 %v1692, %v1691
      %1709 = vmatprep.subr.bf16.mxu0 0
      %1710 = vmatpush1.bf16.msra.mxu0 %v1693
      %1711 = vmatprep.subr.bf16.mxu0 0
      %1712 = vmatpush1.bf16.msra.mxu0 %v1694
      %1713 = vmatprep.subr.bf16.mxu0 0
      %1714 = vmatpush1.bf16.msra.mxu0 %v1695
      %1715 = vmatprep.subr.bf16.mxu0 0
      %1716 = vmatpush1.bf16.msra.mxu0 %v1696
      %1717 = vmatprep.subr.bf16.mxu0 0
      %1718 = vmatpush1.bf16.msra.mxu0 %v1697
      %1719 = vmatprep.subr.bf16.mxu0 0
      %1720 = vmatpush1.bf16.msra.mxu0 %v1698
      %1721 = vmatprep.subr.bf16.mxu0 0
      %1722 = vmatpush1.bf16.msra.mxu0 %v1699
      %1723 = vmatprep.subr.bf16.mxu0 0
      %1724 = vmatpush1.bf16.msra.mxu0 %v1700
      %1725 = vmatprep.subr.bf16.mxu0 0
      %1726 = vmatpush1.bf16.msra.mxu0 0
      %1727 = vmatprep.subr.bf16.mxu0 0
      %1728 = vmatpush1.bf16.msra.mxu0 0
      %1729 = vmatprep.subr.bf16.mxu0 0
      %1730 = vmatpush1.bf16.msra.mxu0 0
      %1731 = vmatprep.subr.bf16.mxu0 0
      %1732 = vmatpush1.bf16.msra.mxu0 0
      %1733 = vmatprep.subr.bf16.mxu0 0
      %1734 = vmatpush1.bf16.msra.mxu0 0
      %1735 = vmatprep.subr.bf16.mxu0 0
      %1736 = vmatpush1.bf16.msra.mxu0 0
      %1737 = vmatprep.subr.bf16.mxu0 0
      %1738 = vmatpush1.bf16.msra.mxu0 0
      %1739 = vmatprep.subr.bf16.mxu0 0
      %1740 = vmatpush1.bf16.msra.mxu0 0
      %1741 = vmatprep.mubr.bf16.mxu0 0
      %1742 = vmatmul.mubr.bf16.gmra.mrb[0].mxu0 %v1659
      %v1743 = vpop.f32.mrb[0].mxu0
      %v1744 = vadd.f32 0.0, %v1743
      %v1745 = vpop.f32.mrb[0].mxu0
      %v1746 = vpop.f32.mrb[0].mxu0
      %v1747 = vpop.f32.mrb[0].mxu0
      %1748 = vdwg.mxu0
      %v1749 = vadd.f32 %v1628, %v1744
      %v1750 = vld [vmem:[#allocation6] sm:$0xe]
      %s1751 = scalar_lea.vmem %s9, 128
      %v1752 = vld [vmem:[%s1751] sm:$0xf]
      %v1753 = vld [vmem:[%s1751 + $0x4] sm:$0xf]
      %v1754 = vld [vmem:[%s1751 + $0x8] sm:$0xf]
      %v1755 = vld [vmem:[%s1751 + $0xc] sm:$0xf]
      %v1756 = vld [vmem:[%s1751 + $0x10] sm:$0xf]
      %v1757 = vld [vmem:[%s1751 + $0x14] sm:$0xf]
      %v1758 = vld [vmem:[%s1751 + $0x18] sm:$0xf]
      %v1759 = vld [vmem:[%s1751 + $0x1c] sm:$0xf]
      %v1760 = vld [vmem:[%s1751 + $0x20] sm:$0xf]
      %v1761 = vld [vmem:[%s1751 + $0x24] sm:$0xf]
      %v1762 = vld [vmem:[%s1751 + $0x28] sm:$0xf]
      %v1763 = vld [vmem:[%s1751 + $0x2c] sm:$0xf]
      %v1764 = vld [vmem:[%s1751 + $0x30] sm:$0xf]
      %v1765 = vld [vmem:[%s1751 + $0x34] sm:$0xf]
      %v1766 = vld [vmem:[%s1751 + $0x38] sm:$0xf]
      %v1767 = vld [vmem:[%s1751 + $0x3c] sm:$0xf]
      %v1769 = vunpack.c.l.b16 %v1750
      %v1770 = vpack.c.b16 %v1651, %v1769
      %v1771 = vrot.slane %v1770, 1
      %v1789 = vunpack.c.l.b16 %v1752
      %v1790 = vunpack.c.l.b16 %v1753
      %v1791 = vunpack.c.l.b16 %v1754
      %v1792 = vunpack.c.l.b16 %v1755
      %v1793 = vunpack.c.l.b16 %v1756
      %v1794 = vunpack.c.l.b16 %v1757
      %v1795 = vunpack.c.l.b16 %v1758
      %v1796 = vunpack.c.l.b16 %v1759
      %v1797 = vunpack.c.l.b16 %v1760
      %v1798 = vunpack.c.l.b16 %v1761
      %v1799 = vunpack.c.l.b16 %v1762
      %v1800 = vunpack.c.l.b16 %v1763
      %v1801 = vunpack.c.l.b16 %v1764
      %v1802 = vunpack.c.l.b16 %v1765
      %v1803 = vunpack.c.l.b16 %v1766
      %v1804 = vunpack.c.l.b16 %v1767
      %v1805 = vpack.c.b16 %v1790, %v1789
      %v1806 = vpack.c.b16 %v1792, %v1791
      %v1807 = vpack.c.b16 %v1794, %v1793
      %v1808 = vpack.c.b16 %v1796, %v1795
      %v1809 = vpack.c.b16 %v1798, %v1797
      %v1810 = vpack.c.b16 %v1800, %v1799
      %v1811 = vpack.c.b16 %v1802, %v1801
      %v1812 = vpack.c.b16 %v1804, %v1803
      %1821 = vmatprep.subr.bf16.mxu0 0
      %1822 = vmatpush1.bf16.msra.mxu0 %v1805
      %1823 = vmatprep.subr.bf16.mxu0 0
      %1824 = vmatpush1.bf16.msra.mxu0 %v1806
      %1825 = vmatprep.subr.bf16.mxu0 0
      %1826 = vmatpush1.bf16.msra.mxu0 %v1807
      %1827 = vmatprep.subr.bf16.mxu0 0
      %1828 = vmatpush1.bf16.msra.mxu0 %v1808
      %1829 = vmatprep.subr.bf16.mxu0 0
      %1830 = vmatpush1.bf16.msra.mxu0 %v1809
      %1831 = vmatprep.subr.bf16.mxu0 0
      %1832 = vmatpush1.bf16.msra.mxu0 %v1810
      %1833 = vmatprep.subr.bf16.mxu0 0
      %1834 = vmatpush1.bf16.msra.mxu0 %v1811
      %1835 = vmatprep.subr.bf16.mxu0 0
      %1836 = vmatpush1.bf16.msra.mxu0 %v1812
      %1837 = vmatprep.subr.bf16.mxu0 0
      %1838 = vmatpush1.bf16.msra.mxu0 0
      %1839 = vmatprep.subr.bf16.mxu0 0
      %1840 = vmatpush1.bf16.msra.mxu0 0
      %1841 = vmatprep.subr.bf16.mxu0 0
      %1842 = vmatpush1.bf16.msra.mxu0 0
      %1843 = vmatprep.subr.bf16.mxu0 0
      %1844 = vmatpush1.bf16.msra.mxu0 0
      %1845 = vmatprep.subr.bf16.mxu0 0
      %1846 = vmatpush1.bf16.msra.mxu0 0
      %1847 = vmatprep.subr.bf16.mxu0 0
      %1848 = vmatpush1.bf16.msra.mxu0 0
      %1849 = vmatprep.subr.bf16.mxu0 0
      %1850 = vmatpush1.bf16.msra.mxu0 0
      %1851 = vmatprep.subr.bf16.mxu0 0
      %1852 = vmatpush1.bf16.msra.mxu0 0
      %1853 = vmatprep.mubr.bf16.mxu0 0
      %1854 = vmatmul.mubr.bf16.gmra.mrb[0].mxu0 %v1771
      %v1855 = vpop.f32.mrb[0].mxu0
      %v1856 = vadd.f32 0.0, %v1855
      %v1857 = vpop.f32.mrb[0].mxu0
      %v1858 = vpop.f32.mrb[0].mxu0
      %v1859 = vpop.f32.mrb[0].mxu0
      %1860 = vdwg.mxu0
      %v1861 = vadd.f32 %v1749, %v1856
      %v1862 = vmax.f32 %v1861, 0.0
      %1863 = vst [vmem:[#allocation7] sm:$0xff] %v1862
      %v1864 = vld [vmem:[#allocation7] ss:$2 sm:$0xf]
      %s1865 = scalar_lea.vmem [#allocation7], 1
      %v1866 = vld [vmem:[%s1865] ss:$2 sm:$0xf]
      %v1867 = vmax.f32 %v1864, %v1866
      %v1868 = vpack.c.bf16 %v1867, %v1867
      %1869 = vst [vmem:[%s438] sm:$0x3] %v1868
      %p1870 = scmp.lt.s32.totalorder %s24, 1
      %s1871 = scalar_select %p1870, %s24, 1
      %s1872 = smul.addr %s1871, 2
      %s1873 = scalar_lea.vmem %s13, %s1872
      // Predicated region
      $region73: #{cnn_feature_forward.1} parent=71 // pred_check
        %p1874 = pneg %p320
      $region74: #{cnn_feature_forward.1} parent=71 // pred_check_branch
        %1876 = sbr.rel (%p1874) target = $region76
      $region75: #{cnn_feature_forward.1} parent=71 // pred_region
        _
      $region76: #{cnn_feature_forward.1} parent=71 // pred_fallthru
        _
    $region72: #{cnn_feature_forward.1} parent=5 // pred_fallthru
      _
    %p1877 = scmp.le.s32.totalorder 2, %s19
    // Predicated region
    $region77: #{cnn_feature_forward.1} parent=5 // pred_check
      %p1878 = pneg %p1877
    $region78: #{cnn_feature_forward.1} parent=5 // pred_check_branch
      %1880 = sbr.rel (%p1878) target = $region80
    $region79: #{cnn_feature_forward.1} parent=5 // pred_region
      %s1881 = ssub.s32 %s19, 2
      // Predicated region
      $region81: #{cnn_feature_forward.1} parent=79 // pred_check
        %p1882 = pneg %p326
      $region82: #{cnn_feature_forward.1} parent=79 // pred_check_branch
        %1884 = sbr.rel (%p1882) target = $region84
      $region83: #{cnn_feature_forward.1} parent=79 // pred_region
        %p1885 = scmp.lt.s32.totalorder %s25, 1
        %s1886 = scalar_select %p1885, %s25, 1
        %s1887 = smul.addr %s1886, 2
        %s1888 = scalar_lea.vmem %s13, %s1887
      $region84: #{cnn_feature_forward.1} parent=79 // pred_fallthru
        _
    $region80: #{cnn_feature_forward.1} parent=5 // pred_fallthru
      _
  $region6: #{cnn_feature_forward.1} parent=0 // loop_footer
    %s23 = sadd.s32 1, %s19
  $region7: #{cnn_feature_forward.1} parent=0 // loop_footer_branch
    %18 = sbr.rel target = $region3
  $region8: #{cnn_feature_forward.1} parent=0 // loop_exit
    _

</llo_original>
